<compile_context>
chip_gen: v7x
topology: tpu7x:2x2x1
jax: 0.10.0
libtpu: 0.0.40
codegen_flags: <defaults>
</compile_context>

<pallas_src>
import jax
import jax.numpy as jnp
import numpy as np
from jax import lax
from jax.experimental import pallas as pl
from jax.experimental.pallas import tpu as pltpu

# ---------------- static configuration (consistent with the module) ----------
B = 2              # batch
T = 8              # input sequence length
LATENT = 64        # latent_dim
HIDDEN = 128       # hidden_dim
OUT_FEAT = 32      # out_feat_dim
OUT_PAD = 128      # lane-dense padded head width (multiple of 128)
UPSAMPLE = [2, 2]
K = 4              # kernel_size = scale_factor * 2 for both blocks (scale=2)
# Conv1dSamePadding with k=4, stride=1, dilation=1: conv padding=2, then cut the
# last element  ==> effective zero padding (left=2, right=1), out length == in.
PAD_L = 2
T2 = T * UPSAMPLE[1]               # 16, after decoder block 1
T4 = T2 * UPSAMPLE[0]              # 32, after decoder block 2
TPAD1 = 16                         # >= T + 3, sublane-aligned scratch rows
TPAD2 = 24                         # >= T2 + 3, sublane-aligned scratch rows


def decoder_mlp_kernel(x_ref, w1_ref, b1_ref, w2_ref, b2_ref,
                       w3_ref, b3_ref, w4_ref, b4_ref, out_ref,
                       xpad_s, h1pad_s):
    """Single program; whole batch folded into the matmul M dimension.

    x_ref   : (B, T, LATENT) f32          channels-last input
    w1_ref  : (K, LATENT, HIDDEN) bf16    conv1 weights, one (Cin,Cout) slab per tap
    w2_ref  : (K, HIDDEN, HIDDEN) bf16    conv2 weights
    w3_ref  : (HIDDEN, HIDDEN)   bf16     head Linear 1
    w4_ref  : (HIDDEN, OUT_PAD)  bf16     head Linear 2 (zero-padded to 128 lanes)
    b*_ref  : (1, N) f32 biases
    out_ref : (2, B, T2, OUT_PAD) f32     head stored twice (store-side upsample x2)
    xpad_s  : (B, TPAD1, LATENT) bf16     zero-padded block-1 activations
    h1pad_s : (B, TPAD2, HIDDEN) bf16     zero-padded block-2 activations
    """
    f32 = jnp.float32
    bf16 = jnp.bfloat16

    # ---- DecoderBlock 1: conv(k=4, "same") -> ReLU -> upsample x2 ------------
    # Zero the padded scratch with one aligned full-tile store, drop the input
    # in at row offset PAD_L, then accumulate K shifted matmuls (no im2col).
    xpad_s[...] = jnp.zeros((B, TPAD1, LATENT), bf16)
    xpad_s[:, PAD_L:PAD_L + T, :] = x_ref[...].astype(bf16)
    acc1 = jnp.zeros((B * T, HIDDEN), f32)
    for k in range(K):
        win = xpad_s[:, k:k + T, :].reshape(B * T, LATENT)
        acc1 += jnp.dot(win, w1_ref[k], preferred_element_type=f32)
    h1 = jnp.maximum(acc1 + b1_ref[...], 0.0).reshape(B, T, HIDDEN)
    # nearest upsample x2 along time (rows); cast to bf16 for the next conv
    h1_up = jnp.broadcast_to(h1[:, :, None, :], (B, T, 2, HIDDEN)) \
               .reshape(B, T2, HIDDEN).astype(bf16)

    # ---- DecoderBlock 2: conv(k=4, "same") -> ReLU (upsample deferred) -------
    h1pad_s[...] = jnp.zeros((B, TPAD2, HIDDEN), bf16)
    h1pad_s[:, PAD_L:PAD_L + T2, :] = h1_up
    acc2 = jnp.zeros((B * T2, HIDDEN), f32)
    for k in range(K):
        win = h1pad_s[:, k:k + T2, :].reshape(B * T2, HIDDEN)
        acc2 += jnp.dot(win, w2_ref[k], preferred_element_type=f32)
    h2 = jnp.maximum(acc2 + b2_ref[...], 0.0)            # (B*T2, HIDDEN) f32

    # ---- MLP head on the un-upsampled rows (rows would be duplicated pairs) --
    h3 = jnp.maximum(jnp.dot(h2.astype(bf16), w3_ref[...],
                             preferred_element_type=f32) + b3_ref[...], 0.0)
    head = jnp.dot(h3.astype(bf16), w4_ref[...],
                   preferred_element_type=f32) + b4_ref[...]   # (B*T2, OUT_PAD)
    head = head.reshape(B, T2, OUT_PAD).astype(out_ref.dtype)

    # ---- final nearest-upsample x2: two contiguous lane-dense stores ---------
    out_ref[0] = head
    out_ref[1] = head


@jax.jit
def decoder_mlp(x_nct, params):
    """x_nct: (B, LATENT, T) float32 (PyTorch NCT). Returns (B, OUT_FEAT, 4*T)."""
    w1, b1, w2, b2, w3, b3, w4, b4 = params
    bf16 = jnp.bfloat16

    # bf16 weights (half the weight DMA, native MXU dtype); conv weights split
    # into K per-tap (Cin, Cout) slabs; last Linear zero-padded to 128 lanes.
    w1b = w1.reshape(K, LATENT, HIDDEN).astype(bf16)
    w2b = w2.reshape(K, HIDDEN, HIDDEN).astype(bf16)
    w3b = w3.astype(bf16)
    w4b = jnp.pad(w4, ((0, 0), (0, OUT_PAD - OUT_FEAT))).astype(bf16)
    b4p = jnp.pad(b4, ((0, 0), (0, OUT_PAD - OUT_FEAT)))

    # NCT -> channels-last at the boundary; time padding happens in-kernel.
    x_tc = jnp.transpose(x_nct, (0, 2, 1))               # (B, T, LATENT)

    vmem = pltpu.MemorySpace.VMEM
    out = pl.pallas_call(
        decoder_mlp_kernel,
        out_shape=jax.ShapeDtypeStruct((2, B, T2, OUT_PAD), jnp.float32),
        in_specs=[pl.BlockSpec(memory_space=vmem)] * 9,
        out_specs=pl.BlockSpec(memory_space=vmem),
        scratch_shapes=[
            pltpu.VMEM((B, TPAD1, LATENT), jnp.bfloat16),   # xpad_s
            pltpu.VMEM((B, TPAD2, HIDDEN), jnp.bfloat16),   # h1pad_s
        ],
        compiler_params=pltpu.CompilerParams(vmem_limit_bytes=16 * 1024 * 1024),
    )(x_tc, w1b, b1, w2b, b2, w3b, b3, w4b, b4p)

    # (2, B, T2, OUT_PAD) -> interleave the two copies along time (nearest x2),
    # drop lane padding, return to the module's NCT convention.
    out_up = jnp.transpose(out, (1, 2, 0, 3)).reshape(B, T4, OUT_PAD)
    return jnp.transpose(out_up[:, :, :OUT_FEAT], (0, 2, 1))


# ---------------- deterministic parameter init --------------------------------
def init_params(key):
    ks = jax.random.split(key, 8)
    s = 0.1
    # conv weights stored as im2col matrices (K*C_in, C_out); row index is
    # k*C_in + ci, equivalent to torch weight (C_out, C_in, K) transposed.
    w1 = jax.random.normal(ks[0], (K * LATENT, HIDDEN), jnp.float32) * s
    b1 = jax.random.normal(ks[1], (1, HIDDEN), jnp.float32) * s
    w2 = jax.random.normal(ks[2], (K * HIDDEN, HIDDEN), jnp.float32) * s
    b2 = jax.random.normal(ks[3], (1, HIDDEN), jnp.float32) * s
    w3 = jax.random.normal(ks[4], (HIDDEN, HIDDEN), jnp.float32) * s
    b3 = jax.random.normal(ks[5], (1, HIDDEN), jnp.float32) * s
    w4 = jax.random.normal(ks[6], (HIDDEN, OUT_FEAT), jnp.float32) * s
    b4 = jax.random.normal(ks[7], (1, OUT_FEAT), jnp.float32) * s
    return (w1, b1, w2, b2, w3, b3, w4, b4)


# ---------------- pure-JAX reference (mirrors the PyTorch module, f32) --------
def ref_forward(x_nct, params):
    w1, b1, w2, b2, w3, b3, w4, b4 = params
    dn = lax.conv_dimension_numbers(x_nct.shape, (HIDDEN, LATENT, K),
                                    ("NCH", "OIH", "NCH"))

    def conv_block(h, w_mat, b_vec, cin):
        # w_mat: (K*cin, cout) -> torch layout (cout, cin, K)
        w_t = jnp.transpose(w_mat.reshape(K, cin, -1), (2, 1, 0))
        y = lax.conv_general_dilated(h, w_t, window_strides=(1,),
                                     padding=[(2, 2)], dimension_numbers=dn)
        y = y[:, :, :-1] + b_vec.reshape(1, -1, 1)   # cut_last_element + bias
        y = jnp.maximum(y, 0.0)
        return jnp.repeat(y, 2, axis=2)              # nearest upsample x2

    h = conv_block(x_nct, w1, b1, LATENT)
    h = conv_block(h, w2, b2, HIDDEN)
    h = jnp.transpose(h, (0, 2, 1))                  # Permute -> (B, T4, HIDDEN)
    h = jnp.maximum(h @ w3 + b3, 0.0)
    h = h @ w4 + b4
    return jnp.transpose(h, (0, 2, 1))               # Permute back -> NCT


if __name__ == "__main__":
    key = jax.random.PRNGKey(0)
    kx, kp = jax.random.split(key)
    x = jax.random.normal(kx, (B, LATENT, T), jnp.float32)
    params = init_params(kp)

    out = jax.block_until_ready(decoder_mlp(x, params))
    assert out.shape == (B, OUT_FEAT, T4), out.shape

    ref = jax.block_until_ready(ref_forward(x, params))
    # bf16 MXU operands (f32 accumulation) -> ~1e-2 agreement with the f32 ref.
    np.testing.assert_allclose(np.asarray(out), np.asarray(ref),
                               rtol=1e-1, atol=1e-1)
    print("KERNEL_OK")
</pallas_src>

<mosaic_0001>
module attributes {stable_mosaic.version = 11 : i64} {
  func.func @decoder_mlp_kernel(%arg0: memref<2x8x64xf32, #tpu.memory_space<vmem>>, %arg1: memref<4x64x128xbf16, #tpu.memory_space<vmem>>, %arg2: memref<1x128xf32, #tpu.memory_space<vmem>>, %arg3: memref<4x128x128xbf16, #tpu.memory_space<vmem>>, %arg4: memref<1x128xf32, #tpu.memory_space<vmem>>, %arg5: memref<128x128xbf16, #tpu.memory_space<vmem>>, %arg6: memref<1x128xf32, #tpu.memory_space<vmem>>, %arg7: memref<128x128xbf16, #tpu.memory_space<vmem>>, %arg8: memref<1x128xf32, #tpu.memory_space<vmem>>, %arg9: memref<2x2x16x128xf32, #tpu.memory_space<vmem>>, %arg10: memref<2x16x64xbf16, #tpu.memory_space<vmem>>, %arg11: memref<2x24x128xbf16, #tpu.memory_space<vmem>>) attributes {dimension_semantics = [], scalar_prefetch = 0 : i64, scratch_operands = 2 : i64, tpu.core_type = #tpu.core_type<tc>} {
    %cst = arith.constant 0.000000e+00 : bf16
    %0 = vector.broadcast %cst : bf16 to vector<2x16x64xbf16>
    %c0 = arith.constant 0 : index
    %c0_0 = arith.constant 0 : index
    %c0_1 = arith.constant 0 : index
    %1 = vector.load %arg10[%c0, %c0_0, %c0_1] : memref<2x16x64xbf16, #tpu.memory_space<vmem>>, vector<2x16x64xbf16>
    tpu.vector_store %arg10[%c0, %c0_0, %c0_1], %0 {strides = array<i32>} : memref<2x16x64xbf16, #tpu.memory_space<vmem>>, vector<2x16x64xbf16>,
    %c0_2 = arith.constant 0 : index
    %c0_3 = arith.constant 0 : index
    %c0_4 = arith.constant 0 : index
    %2 = vector.load %arg0[%c0_2, %c0_3, %c0_4] : memref<2x8x64xf32, #tpu.memory_space<vmem>>, vector<2x8x64xf32>
    %3 = arith.truncf %2 : vector<2x8x64xf32> to vector<2x8x64xbf16>
    %c0_5 = arith.constant 0 : index
    %c2 = arith.constant 2 : index
    %c0_6 = arith.constant 0 : index
    %4 = vector.load %arg10[%c0_5, %c2, %c0_6] : memref<2x16x64xbf16, #tpu.memory_space<vmem>>, vector<2x8x64xbf16>
    tpu.vector_store %arg10[%c0_5, %c2, %c0_6], %3 {strides = array<i32>} : memref<2x16x64xbf16, #tpu.memory_space<vmem>>, vector<2x8x64xbf16>,
    %cst_7 = arith.constant 0.000000e+00 : f32
    %5 = vector.broadcast %cst_7 : f32 to vector<16x128xf32>
    %c0_8 = arith.constant 0 : index
    %c0_9 = arith.constant 0 : index
    %c0_10 = arith.constant 0 : index
    %6 = vector.load %arg10[%c0_8, %c0_9, %c0_10] : memref<2x16x64xbf16, #tpu.memory_space<vmem>>, vector<2x8x64xbf16>
    %7 = vector.shape_cast %6 : vector<2x8x64xbf16> to vector<16x64xbf16>
    %c0_11 = arith.constant 0 : index
    %c0_12 = arith.constant 0 : index
    %c0_13 = arith.constant 0 : index
    %8 = vector.load %arg1[%c0_11, %c0_12, %c0_13] : memref<4x64x128xbf16, #tpu.memory_space<vmem>>, vector<1x64x128xbf16>
    %9 = vector.shape_cast %8 : vector<1x64x128xbf16> to vector<64x128xbf16>
    %cst_14 = arith.constant dense<0.000000e+00> : vector<16x128xf32>
    %10 = tpu.matmul %7, %9, %cst_14 {dimension_numbers = #tpu.dot_dimension_numbers<[1], [0], [0], [1], [0, 0, 1, 1], [], []>} : vector<16x64xbf16>, vector<64x128xbf16>, vector<16x128xf32> -> vector<16x128xf32>
    %11 = arith.addf %5, %10 : vector<16x128xf32>
    %c0_15 = arith.constant 0 : index
    %c1 = arith.constant 1 : index
    %c0_16 = arith.constant 0 : index
    %12 = vector.load %arg10[%c0_15, %c1, %c0_16] : memref<2x16x64xbf16, #tpu.memory_space<vmem>>, vector<2x8x64xbf16>
    %13 = vector.shape_cast %12 : vector<2x8x64xbf16> to vector<16x64xbf16>
    %c1_17 = arith.constant 1 : index
    %c0_18 = arith.constant 0 : index
    %c0_19 = arith.constant 0 : index
    %14 = vector.load %arg1[%c1_17, %c0_18, %c0_19] : memref<4x64x128xbf16, #tpu.memory_space<vmem>>, vector<1x64x128xbf16>
    %15 = vector.shape_cast %14 : vector<1x64x128xbf16> to vector<64x128xbf16>
    %cst_20 = arith.constant dense<0.000000e+00> : vector<16x128xf32>
    %16 = tpu.matmul %13, %15, %cst_20 {dimension_numbers = #tpu.dot_dimension_numbers<[1], [0], [0], [1], [0, 0, 1, 1], [], []>} : vector<16x64xbf16>, vector<64x128xbf16>, vector<16x128xf32> -> vector<16x128xf32>
    %17 = arith.addf %11, %16 : vector<16x128xf32>
    %c0_21 = arith.constant 0 : index
    %c2_22 = arith.constant 2 : index
    %c0_23 = arith.constant 0 : index
    %18 = vector.load %arg10[%c0_21, %c2_22, %c0_23] : memref<2x16x64xbf16, #tpu.memory_space<vmem>>, vector<2x8x64xbf16>
    %19 = vector.shape_cast %18 : vector<2x8x64xbf16> to vector<16x64xbf16>
    %c2_24 = arith.constant 2 : index
    %c0_25 = arith.constant 0 : index
    %c0_26 = arith.constant 0 : index
    %20 = vector.load %arg1[%c2_24, %c0_25, %c0_26] : memref<4x64x128xbf16, #tpu.memory_space<vmem>>, vector<1x64x128xbf16>
    %21 = vector.shape_cast %20 : vector<1x64x128xbf16> to vector<64x128xbf16>
    %cst_27 = arith.constant dense<0.000000e+00> : vector<16x128xf32>
    %22 = tpu.matmul %19, %21, %cst_27 {dimension_numbers = #tpu.dot_dimension_numbers<[1], [0], [0], [1], [0, 0, 1, 1], [], []>} : vector<16x64xbf16>, vector<64x128xbf16>, vector<16x128xf32> -> vector<16x128xf32>
    %23 = arith.addf %17, %22 : vector<16x128xf32>
    %c0_28 = arith.constant 0 : index
    %c3 = arith.constant 3 : index
    %c0_29 = arith.constant 0 : index
    %24 = vector.load %arg10[%c0_28, %c3, %c0_29] : memref<2x16x64xbf16, #tpu.memory_space<vmem>>, vector<2x8x64xbf16>
    %25 = vector.shape_cast %24 : vector<2x8x64xbf16> to vector<16x64xbf16>
    %c3_30 = arith.constant 3 : index
    %c0_31 = arith.constant 0 : index
    %c0_32 = arith.constant 0 : index
    %26 = vector.load %arg1[%c3_30, %c0_31, %c0_32] : memref<4x64x128xbf16, #tpu.memory_space<vmem>>, vector<1x64x128xbf16>
    %27 = vector.shape_cast %26 : vector<1x64x128xbf16> to vector<64x128xbf16>
    %cst_33 = arith.constant dense<0.000000e+00> : vector<16x128xf32>
    %28 = tpu.matmul %25, %27, %cst_33 {dimension_numbers = #tpu.dot_dimension_numbers<[1], [0], [0], [1], [0, 0, 1, 1], [], []>} : vector<16x64xbf16>, vector<64x128xbf16>, vector<16x128xf32> -> vector<16x128xf32>
    %29 = arith.addf %23, %28 : vector<16x128xf32>
    %c0_34 = arith.constant 0 : index
    %c0_35 = arith.constant 0 : index
    %30 = vector.load %arg2[%c0_34, %c0_35] : memref<1x128xf32, #tpu.memory_space<vmem>>, vector<1x128xf32>
    %31 = vector.broadcast %30 : vector<1x128xf32> to vector<16x128xf32>
    %32 = arith.addf %29, %31 : vector<16x128xf32>
    %cst_36 = arith.constant 0.000000e+00 : f32
    %33 = vector.broadcast %cst_36 : f32 to vector<16x128xf32>
    %34 = arith.maximumf %32, %33 : vector<16x128xf32>
    %35 = vector.shape_cast %34 : vector<16x128xf32> to vector<2x8x128xf32>
    %36 = vector.shape_cast %35 : vector<2x8x128xf32> to vector<2x8x1x128xf32>
    %37 = vector.shape_cast %36 : vector<2x8x1x128xf32> to vector<2x8x1x128xf32>
    %38 = vector.broadcast %37 : vector<2x8x1x128xf32> to vector<2x8x2x128xf32>
    %39 = vector.shape_cast %38 : vector<2x8x2x128xf32> to vector<2x16x128xf32>
    %40 = arith.truncf %39 : vector<2x16x128xf32> to vector<2x16x128xbf16>
    %cst_37 = arith.constant 0.000000e+00 : bf16
    %41 = vector.broadcast %cst_37 : bf16 to vector<2x24x128xbf16>
    %c0_38 = arith.constant 0 : index
    %c0_39 = arith.constant 0 : index
    %c0_40 = arith.constant 0 : index
    %42 = vector.load %arg11[%c0_38, %c0_39, %c0_40] : memref<2x24x128xbf16, #tpu.memory_space<vmem>>, vector<2x24x128xbf16>
    tpu.vector_store %arg11[%c0_38, %c0_39, %c0_40], %41 {strides = array<i32>} : memref<2x24x128xbf16, #tpu.memory_space<vmem>>, vector<2x24x128xbf16>,
    %c0_41 = arith.constant 0 : index
    %c2_42 = arith.constant 2 : index
    %c0_43 = arith.constant 0 : index
    %43 = vector.load %arg11[%c0_41, %c2_42, %c0_43] : memref<2x24x128xbf16, #tpu.memory_space<vmem>>, vector<2x16x128xbf16>
    tpu.vector_store %arg11[%c0_41, %c2_42, %c0_43], %40 {strides = array<i32>} : memref<2x24x128xbf16, #tpu.memory_space<vmem>>, vector<2x16x128xbf16>,
    %cst_44 = arith.constant 0.000000e+00 : f32
    %44 = vector.broadcast %cst_44 : f32 to vector<32x128xf32>
    %c0_45 = arith.constant 0 : index
    %c0_46 = arith.constant 0 : index
    %c0_47 = arith.constant 0 : index
    %45 = vector.load %arg11[%c0_45, %c0_46, %c0_47] : memref<2x24x128xbf16, #tpu.memory_space<vmem>>, vector<2x16x128xbf16>
    %46 = vector.shape_cast %45 : vector<2x16x128xbf16> to vector<32x128xbf16>
    %c0_48 = arith.constant 0 : index
    %c0_49 = arith.constant 0 : index
    %c0_50 = arith.constant 0 : index
    %47 = vector.load %arg3[%c0_48, %c0_49, %c0_50] : memref<4x128x128xbf16, #tpu.memory_space<vmem>>, vector<1x128x128xbf16>
    %48 = vector.shape_cast %47 : vector<1x128x128xbf16> to vector<128x128xbf16>
    %cst_51 = arith.constant dense<0.000000e+00> : vector<32x128xf32>
    %49 = tpu.matmul %46, %48, %cst_51 {dimension_numbers = #tpu.dot_dimension_numbers<[1], [0], [0], [1], [0, 0, 1, 1], [], []>} : vector<32x128xbf16>, vector<128x128xbf16>, vector<32x128xf32> -> vector<32x128xf32>
    %50 = arith.addf %44, %49 : vector<32x128xf32>
    %c0_52 = arith.constant 0 : index
    %c1_53 = arith.constant 1 : index
    %c0_54 = arith.constant 0 : index
    %51 = vector.load %arg11[%c0_52, %c1_53, %c0_54] : memref<2x24x128xbf16, #tpu.memory_space<vmem>>, vector<2x16x128xbf16>
    %52 = vector.shape_cast %51 : vector<2x16x128xbf16> to vector<32x128xbf16>
    %c1_55 = arith.constant 1 : index
    %c0_56 = arith.constant 0 : index
    %c0_57 = arith.constant 0 : index
    %53 = vector.load %arg3[%c1_55, %c0_56, %c0_57] : memref<4x128x128xbf16, #tpu.memory_space<vmem>>, vector<1x128x128xbf16>
    %54 = vector.shape_cast %53 : vector<1x128x128xbf16> to vector<128x128xbf16>
    %cst_58 = arith.constant dense<0.000000e+00> : vector<32x128xf32>
    %55 = tpu.matmul %52, %54, %cst_58 {dimension_numbers = #tpu.dot_dimension_numbers<[1], [0], [0], [1], [0, 0, 1, 1], [], []>} : vector<32x128xbf16>, vector<128x128xbf16>, vector<32x128xf32> -> vector<32x128xf32>
    %56 = arith.addf %50, %55 : vector<32x128xf32>
    %c0_59 = arith.constant 0 : index
    %c2_60 = arith.constant 2 : index
    %c0_61 = arith.constant 0 : index
    %57 = vector.load %arg11[%c0_59, %c2_60, %c0_61] : memref<2x24x128xbf16, #tpu.memory_space<vmem>>, vector<2x16x128xbf16>
    %58 = vector.shape_cast %57 : vector<2x16x128xbf16> to vector<32x128xbf16>
    %c2_62 = arith.constant 2 : index
    %c0_63 = arith.constant 0 : index
    %c0_64 = arith.constant 0 : index
    %59 = vector.load %arg3[%c2_62, %c0_63, %c0_64] : memref<4x128x128xbf16, #tpu.memory_space<vmem>>, vector<1x128x128xbf16>
    %60 = vector.shape_cast %59 : vector<1x128x128xbf16> to vector<128x128xbf16>
    %cst_65 = arith.constant dense<0.000000e+00> : vector<32x128xf32>
    %61 = tpu.matmul %58, %60, %cst_65 {dimension_numbers = #tpu.dot_dimension_numbers<[1], [0], [0], [1], [0, 0, 1, 1], [], []>} : vector<32x128xbf16>, vector<128x128xbf16>, vector<32x128xf32> -> vector<32x128xf32>
    %62 = arith.addf %56, %61 : vector<32x128xf32>
    %c0_66 = arith.constant 0 : index
    %c3_67 = arith.constant 3 : index
    %c0_68 = arith.constant 0 : index
    %63 = vector.load %arg11[%c0_66, %c3_67, %c0_68] : memref<2x24x128xbf16, #tpu.memory_space<vmem>>, vector<2x16x128xbf16>
    %64 = vector.shape_cast %63 : vector<2x16x128xbf16> to vector<32x128xbf16>
    %c3_69 = arith.constant 3 : index
    %c0_70 = arith.constant 0 : index
    %c0_71 = arith.constant 0 : index
    %65 = vector.load %arg3[%c3_69, %c0_70, %c0_71] : memref<4x128x128xbf16, #tpu.memory_space<vmem>>, vector<1x128x128xbf16>
    %66 = vector.shape_cast %65 : vector<1x128x128xbf16> to vector<128x128xbf16>
    %cst_72 = arith.constant dense<0.000000e+00> : vector<32x128xf32>
    %67 = tpu.matmul %64, %66, %cst_72 {dimension_numbers = #tpu.dot_dimension_numbers<[1], [0], [0], [1], [0, 0, 1, 1], [], []>} : vector<32x128xbf16>, vector<128x128xbf16>, vector<32x128xf32> -> vector<32x128xf32>
    %68 = arith.addf %62, %67 : vector<32x128xf32>
    %c0_73 = arith.constant 0 : index
    %c0_74 = arith.constant 0 : index
    %69 = vector.load %arg4[%c0_73, %c0_74] : memref<1x128xf32, #tpu.memory_space<vmem>>, vector<1x128xf32>
    %70 = vector.broadcast %69 : vector<1x128xf32> to vector<32x128xf32>
    %71 = arith.addf %68, %70 : vector<32x128xf32>
    %cst_75 = arith.constant 0.000000e+00 : f32
    %72 = vector.broadcast %cst_75 : f32 to vector<32x128xf32>
    %73 = arith.maximumf %71, %72 : vector<32x128xf32>
    %74 = arith.truncf %73 : vector<32x128xf32> to vector<32x128xbf16>
    %c0_76 = arith.constant 0 : index
    %c0_77 = arith.constant 0 : index
    %75 = vector.load %arg5[%c0_76, %c0_77] : memref<128x128xbf16, #tpu.memory_space<vmem>>, vector<128x128xbf16>
    %cst_78 = arith.constant dense<0.000000e+00> : vector<32x128xf32>
    %76 = tpu.matmul %74, %75, %cst_78 {dimension_numbers = #tpu.dot_dimension_numbers<[1], [0], [0], [1], [0, 0, 1, 1], [], []>} : vector<32x128xbf16>, vector<128x128xbf16>, vector<32x128xf32> -> vector<32x128xf32>
    %c0_79 = arith.constant 0 : index
    %c0_80 = arith.constant 0 : index
    %77 = vector.load %arg6[%c0_79, %c0_80] : memref<1x128xf32, #tpu.memory_space<vmem>>, vector<1x128xf32>
    %78 = vector.broadcast %77 : vector<1x128xf32> to vector<32x128xf32>
    %79 = arith.addf %76, %78 : vector<32x128xf32>
    %cst_81 = arith.constant 0.000000e+00 : f32
    %80 = vector.broadcast %cst_81 : f32 to vector<32x128xf32>
    %81 = arith.maximumf %79, %80 : vector<32x128xf32>
    %82 = arith.truncf %81 : vector<32x128xf32> to vector<32x128xbf16>
    %c0_82 = arith.constant 0 : index
    %c0_83 = arith.constant 0 : index
    %83 = vector.load %arg7[%c0_82, %c0_83] : memref<128x128xbf16, #tpu.memory_space<vmem>>, vector<128x128xbf16>
    %cst_84 = arith.constant dense<0.000000e+00> : vector<32x128xf32>
    %84 = tpu.matmul %82, %83, %cst_84 {dimension_numbers = #tpu.dot_dimension_numbers<[1], [0], [0], [1], [0, 0, 1, 1], [], []>} : vector<32x128xbf16>, vector<128x128xbf16>, vector<32x128xf32> -> vector<32x128xf32>
    %c0_85 = arith.constant 0 : index
    %c0_86 = arith.constant 0 : index
    %85 = vector.load %arg8[%c0_85, %c0_86] : memref<1x128xf32, #tpu.memory_space<vmem>>, vector<1x128xf32>
    %86 = vector.broadcast %85 : vector<1x128xf32> to vector<32x128xf32>
    %87 = arith.addf %84, %86 : vector<32x128xf32>
    %88 = vector.shape_cast %87 : vector<32x128xf32> to vector<2x16x128xf32>
    %c0_87 = arith.constant 0 : index
    %c0_88 = arith.constant 0 : index
    %c0_89 = arith.constant 0 : index
    %c0_90 = arith.constant 0 : index
    %89 = vector.load %arg9[%c0_87, %c0_88, %c0_89, %c0_90] : memref<2x2x16x128xf32, #tpu.memory_space<vmem>>, vector<1x2x16x128xf32>
    %90 = vector.shape_cast %89 : vector<1x2x16x128xf32> to vector<2x16x128xf32>
    %91 = vector.shape_cast %88 : vector<2x16x128xf32> to vector<1x2x16x128xf32>
    tpu.vector_store %arg9[%c0_87, %c0_88, %c0_89, %c0_90], %91 {strides = array<i32>} : memref<2x2x16x128xf32, #tpu.memory_space<vmem>>, vector<1x2x16x128xf32>,
    %c1_91 = arith.constant 1 : index
    %c0_92 = arith.constant 0 : index
    %c0_93 = arith.constant 0 : index
    %c0_94 = arith.constant 0 : index
    %92 = vector.load %arg9[%c1_91, %c0_92, %c0_93, %c0_94] : memref<2x2x16x128xf32, #tpu.memory_space<vmem>>, vector<1x2x16x128xf32>
    %93 = vector.shape_cast %92 : vector<1x2x16x128xf32> to vector<2x16x128xf32>
    %94 = vector.shape_cast %88 : vector<2x16x128xf32> to vector<1x2x16x128xf32>
    tpu.vector_store %arg9[%c1_91, %c0_92, %c0_93, %c0_94], %94 {strides = array<i32>} : memref<2x2x16x128xf32, #tpu.memory_space<vmem>>, vector<1x2x16x128xf32>,
    return
  }
}

</mosaic_0001>

<llo_original>
// kernel: decoder_mlp.1
$region0: #{decoder_mlp.1}
  #allocation0 [shape = 'u32[]', space=smem, size = 0x4, offset = 0x4, fixed_abs, tag = 'smem constant byte address 0x4 - core index']
  #allocation1 [shape = 'u32[144,128]{1,0:T(1,128)}', space=vmem, size = 0x12000, scoped, tag = 'internal scratch']
  #allocation2 [shape = 'bf16[2,16,64]{2,1,0:T(16,128)(2,1)}', space=vmem, size = 0x2000, scoped, tag = 'scratch operand']
  #allocation3 [shape = 'bf16[2,24,128]{2,1,0:T(8,128)(2,1)}', space=vmem, size = 0x3000, scoped, tag = 'scratch operand']
  %s0 = inlined_call_operand.vmem [shape: f32[2,8,64], index: 0, kind: input, shape index: {}]
  %s1 = inlined_call_operand.vmem [shape: bf16[4,64,128], index: 1, kind: input, shape index: {}]
  %s2 = inlined_call_operand.vmem [shape: f32[1,128], index: 2, kind: input, shape index: {}]
  %s3 = inlined_call_operand.vmem [shape: bf16[4,128,128], index: 3, kind: input, shape index: {}]
  %s4 = inlined_call_operand.vmem [shape: f32[1,128], index: 4, kind: input, shape index: {}]
  %s5 = inlined_call_operand.vmem [shape: bf16[128,128], index: 5, kind: input, shape index: {}]
  %s6 = inlined_call_operand.vmem [shape: f32[1,128], index: 6, kind: input, shape index: {}]
  %s7 = inlined_call_operand.vmem [shape: bf16[128,128], index: 7, kind: input, shape index: {}]
  %s8 = inlined_call_operand.vmem [shape: f32[1,128], index: 8, kind: input, shape index: {}]
  %s9 = inlined_call_operand.vmem [shape: f32[2,2,16,128], index: 9, kind: output, shape index: {}]
  %s10 = sld [smem:[#allocation0]]
  $region46: #{decoder_mlp.1} parent=0
    _
  %s12 = ssub.s32 1, %s10
  %s13 = scalar_select 0, %s12, %s10
  // Predicated region
  $region2: #{decoder_mlp.1} parent=0 // pred_check
    _
  $region3: #{decoder_mlp.1} parent=0 // pred_check_branch
    %15 = sbr.rel (0) target = $region5
  $region4: #{decoder_mlp.1} parent=0 // pred_region
    _
  $region5: #{decoder_mlp.1} parent=0 // pred_fallthru
    _
  // Predicated region
  $region6: #{decoder_mlp.1} parent=0 // pred_check
    _
  $region7: #{decoder_mlp.1} parent=0 // pred_check_branch
    %17 = sbr.rel (0) target = $region9
  $region8: #{decoder_mlp.1} parent=0 // pred_region
    _
  $region9: #{decoder_mlp.1} parent=0 // pred_fallthru
    _
  // Predicated region
  $region10: #{decoder_mlp.1} parent=0 // pred_check
    _
  $region11: #{decoder_mlp.1} parent=0 // pred_check_branch
    %19 = sbr.rel (0) target = $region13
  $region12: #{decoder_mlp.1} parent=0 // pred_region
    _
  $region13: #{decoder_mlp.1} parent=0 // pred_fallthru
    _
  // Predicated region
  $region14: #{decoder_mlp.1} parent=0 // pred_check
    _
  $region15: #{decoder_mlp.1} parent=0 // pred_check_branch
    %21 = sbr.rel (0) target = $region17
  $region16: #{decoder_mlp.1} parent=0 // pred_region
    _
  $region17: #{decoder_mlp.1} parent=0 // pred_fallthru
    _
  // Predicated region
  $region18: #{decoder_mlp.1} parent=0 // pred_check
    _
  $region19: #{decoder_mlp.1} parent=0 // pred_check_branch
    %23 = sbr.rel (0) target = $region21
  $region20: #{decoder_mlp.1} parent=0 // pred_region
    _
  $region21: #{decoder_mlp.1} parent=0 // pred_fallthru
    _
  // Predicated region
  $region22: #{decoder_mlp.1} parent=0 // pred_check
    _
  $region23: #{decoder_mlp.1} parent=0 // pred_check_branch
    %25 = sbr.rel (0) target = $region25
  $region24: #{decoder_mlp.1} parent=0 // pred_region
    _
  $region25: #{decoder_mlp.1} parent=0 // pred_fallthru
    _
  // Predicated region
  $region26: #{decoder_mlp.1} parent=0 // pred_check
    _
  $region27: #{decoder_mlp.1} parent=0 // pred_check_branch
    %27 = sbr.rel (0) target = $region29
  $region28: #{decoder_mlp.1} parent=0 // pred_region
    _
  $region29: #{decoder_mlp.1} parent=0 // pred_fallthru
    _
  // Predicated region
  $region30: #{decoder_mlp.1} parent=0 // pred_check
    _
  $region31: #{decoder_mlp.1} parent=0 // pred_check_branch
    %29 = sbr.rel (0) target = $region33
  $region32: #{decoder_mlp.1} parent=0 // pred_region
    _
  $region33: #{decoder_mlp.1} parent=0 // pred_fallthru
    _
  // Predicated region
  $region34: #{decoder_mlp.1} parent=0 // pred_check
    _
  $region35: #{decoder_mlp.1} parent=0 // pred_check_branch
    %31 = sbr.rel (0) target = $region37
  $region36: #{decoder_mlp.1} parent=0 // pred_region
    _
  $region37: #{decoder_mlp.1} parent=0 // pred_fallthru
    _
  %vm33 = vcmask 523264
  %34 = vst.msk [vmem:[#allocation2] sm:$0xff] %vm33, 0
  %35 = vst.msk [vmem:[#allocation2 + $0x8] sm:$0xff] %vm33, 0
  %v36 = vld [vmem:[%s0] sm:$0xff]
  %v37 = vld [vmem:[%s0 + $0x8] sm:$0xff]
  %v38 = vpack.c.bf16 %v36, %v36
  %v39 = vpack.c.bf16 %v37, %v37
  %v42 = vrot.slane %v38, 7
  %v43 = vrot.slane %v39, 7
  %vm46 = vcmask 520193
  %47 = vst.msk [vmem:[#allocation2] sm:$0x1e] %vm46, %v42
  %48 = vst.msk [vmem:[#allocation2 + $0x8] sm:$0x1e] %vm46, %v43
  %v49 = vld [vmem:[#allocation2] sm:$0xf]
  %v50 = vld [vmem:[#allocation2 + $0x8] sm:$0xf]
  %v51 = vld [vmem:[%s1] sm:$0xf]
  %v52 = vld [vmem:[%s1 + $0x4] sm:$0xf]
  %v53 = vld [vmem:[%s1 + $0x8] sm:$0xf]
  %v54 = vld [vmem:[%s1 + $0xc] sm:$0xf]
  %v55 = vld [vmem:[%s1 + $0x10] sm:$0xf]
  %v56 = vld [vmem:[%s1 + $0x14] sm:$0xf]
  %v57 = vld [vmem:[%s1 + $0x18] sm:$0xf]
  %v58 = vld [vmem:[%s1 + $0x1c] sm:$0xf]
  %v59 = vld [vmem:[#allocation2] sm:$0x1f]
  %v60 = vld [vmem:[#allocation2 + $0x8] sm:$0x1f]
  %v63 = vunpack.c.l.b16 %v59
  %v64 = vunpack.c.h.b16 %v59
  %v65 = vunpack.c.l.b16 %v60
  %v66 = vunpack.c.h.b16 %v60
  %v67 = vpack.c.b16 %v63, %v63
  %v68 = vpack.c.b16 %v64, %v64
  %v69 = vpack.c.b16 %v65, %v65
  %v70 = vpack.c.b16 %v66, %v66
  %vm71 = vsmask.f32 3328
  %vm72 = vsmask.f32 7440
  %vm73 = vmor %vm71, %vm72
  %v75 = vshrl.u32 %v67, 16
  %v77 = vrot.slane %v75, 4
  %v78 = vshll.u32 %v67, 16
  %v80 = vrot.slane %v78, 5
  %v81 = vor.u32 %v77, %v80
  %v82 = vrot.slane %v81, 4
  %v84 = vshll.u32 %v68, 16
  %v86 = vrot.slane %v84, 5
  %v87 = vsel %vm73, %v82, %v86
  %v89 = vshrl.u32 %v69, 16
  %v91 = vrot.slane %v89, 4
  %v92 = vshll.u32 %v69, 16
  %v94 = vrot.slane %v92, 5
  %v95 = vor.u32 %v91, %v94
  %v96 = vrot.slane %v95, 4
  %v98 = vshll.u32 %v70, 16
  %v100 = vrot.slane %v98, 5
  %v101 = vsel %vm73, %v96, %v100
  %s102 = scalar_lea.vmem %s1, 32
  %v103 = vld [vmem:[%s102] sm:$0xf]
  %v104 = vld [vmem:[%s102 + $0x4] sm:$0xf]
  %v105 = vld [vmem:[%s102 + $0x8] sm:$0xf]
  %v106 = vld [vmem:[%s102 + $0xc] sm:$0xf]
  %v107 = vld [vmem:[%s102 + $0x10] sm:$0xf]
  %v108 = vld [vmem:[%s102 + $0x14] sm:$0xf]
  %v109 = vld [vmem:[%s102 + $0x18] sm:$0xf]
  %v110 = vld [vmem:[%s102 + $0x1c] sm:$0xf]
  %v111 = vunpack.c.l.b16 %v87
  %v112 = vunpack.c.l.b16 %v101
  %v113 = vpack.c.b16 %v112, %v111
  %v122 = vunpack.c.l.b16 %v103
  %v123 = vunpack.c.l.b16 %v104
  %v124 = vunpack.c.l.b16 %v105
  %v125 = vunpack.c.l.b16 %v106
  %v126 = vunpack.c.l.b16 %v107
  %v127 = vunpack.c.l.b16 %v108
  %v128 = vunpack.c.l.b16 %v109
  %v129 = vunpack.c.l.b16 %v110
  %v130 = vpack.c.b16 %v123, %v122
  %v131 = vpack.c.b16 %v125, %v124
  %v132 = vpack.c.b16 %v127, %v126
  %v133 = vpack.c.b16 %v129, %v128
  %v139 = vsel %vm33, %v113, 0
  %141 = vmatprep.subr.bf16.mxu0 0
  %142 = vmatpush1.bf16.msra.mxu0 %v130
  %143 = vmatprep.subr.bf16.mxu0 0
  %144 = vmatpush1.bf16.msra.mxu0 %v131
  %145 = vmatprep.subr.bf16.mxu0 0
  %146 = vmatpush1.bf16.msra.mxu0 %v132
  %147 = vmatprep.subr.bf16.mxu0 0
  %148 = vmatpush1.bf16.msra.mxu0 %v133
  %149 = vmatprep.subr.bf16.mxu0 0
  %150 = vmatpush1.bf16.msra.mxu0 0
  %151 = vmatprep.subr.bf16.mxu0 0
  %152 = vmatpush1.bf16.msra.mxu0 0
  %153 = vmatprep.subr.bf16.mxu0 0
  %154 = vmatpush1.bf16.msra.mxu0 0
  %155 = vmatprep.subr.bf16.mxu0 0
  %156 = vmatpush1.bf16.msra.mxu0 0
  %157 = vmatprep.subr.bf16.mxu0 0
  %158 = vmatpush1.bf16.msra.mxu0 0
  %159 = vmatprep.subr.bf16.mxu0 0
  %160 = vmatpush1.bf16.msra.mxu0 0
  %161 = vmatprep.subr.bf16.mxu0 0
  %162 = vmatpush1.bf16.msra.mxu0 0
  %163 = vmatprep.subr.bf16.mxu0 0
  %164 = vmatpush1.bf16.msra.mxu0 0
  %165 = vmatprep.subr.bf16.mxu0 0
  %166 = vmatpush1.bf16.msra.mxu0 0
  %167 = vmatprep.subr.bf16.mxu0 0
  %168 = vmatpush1.bf16.msra.mxu0 0
  %169 = vmatprep.subr.bf16.mxu0 0
  %170 = vmatpush1.bf16.msra.mxu0 0
  %171 = vmatprep.subr.bf16.mxu0 0
  %172 = vmatpush1.bf16.msra.mxu0 0
  %173 = vmatprep.mubr.bf16.mxu0 0
  %174 = vmatmul.mubr.bf16.gmra.mrb[0].mxu0 %v139
  %v175 = vpop.f32.mrb[0].mxu0
  %v176 = vadd.f32 0.0, %v175
  %v177 = vpop.f32.mrb[0].mxu0
  %v178 = vpop.f32.mrb[0].mxu0
  %v179 = vadd.f32 0.0, %v178
  %v180 = vpop.f32.mrb[0].mxu0
  %181 = vdwg.mxu0
  %v184 = vunpack.c.l.b16 %v49
  %v185 = vunpack.c.l.b16 %v50
  %v186 = vpack.c.b16 %v185, %v184
  %v195 = vunpack.c.l.b16 %v51
  %v196 = vunpack.c.l.b16 %v52
  %v197 = vunpack.c.l.b16 %v53
  %v198 = vunpack.c.l.b16 %v54
  %v199 = vunpack.c.l.b16 %v55
  %v200 = vunpack.c.l.b16 %v56
  %v201 = vunpack.c.l.b16 %v57
  %v202 = vunpack.c.l.b16 %v58
  %v203 = vpack.c.b16 %v196, %v195
  %v204 = vpack.c.b16 %v198, %v197
  %v205 = vpack.c.b16 %v200, %v199
  %v206 = vpack.c.b16 %v202, %v201
  %v212 = vsel %vm33, %v186, 0
  %214 = vmatprep.subr.bf16.mxu0 0
  %215 = vmatpush1.bf16.msra.mxu0 %v203
  %216 = vmatprep.subr.bf16.mxu0 0
  %217 = vmatpush1.bf16.msra.mxu0 %v204
  %218 = vmatprep.subr.bf16.mxu0 0
  %219 = vmatpush1.bf16.msra.mxu0 %v205
  %220 = vmatprep.subr.bf16.mxu0 0
  %221 = vmatpush1.bf16.msra.mxu0 %v206
  %222 = vmatprep.subr.bf16.mxu0 0
  %223 = vmatpush1.bf16.msra.mxu0 0
  %224 = vmatprep.subr.bf16.mxu0 0
  %225 = vmatpush1.bf16.msra.mxu0 0
  %226 = vmatprep.subr.bf16.mxu0 0
  %227 = vmatpush1.bf16.msra.mxu0 0
  %228 = vmatprep.subr.bf16.mxu0 0
  %229 = vmatpush1.bf16.msra.mxu0 0
  %230 = vmatprep.subr.bf16.mxu0 0
  %231 = vmatpush1.bf16.msra.mxu0 0
  %232 = vmatprep.subr.bf16.mxu0 0
  %233 = vmatpush1.bf16.msra.mxu0 0
  %234 = vmatprep.subr.bf16.mxu0 0
  %235 = vmatpush1.bf16.msra.mxu0 0
  %236 = vmatprep.subr.bf16.mxu0 0
  %237 = vmatpush1.bf16.msra.mxu0 0
  %238 = vmatprep.subr.bf16.mxu0 0
  %239 = vmatpush1.bf16.msra.mxu0 0
  %240 = vmatprep.subr.bf16.mxu0 0
  %241 = vmatpush1.bf16.msra.mxu0 0
  %242 = vmatprep.subr.bf16.mxu0 0
  %243 = vmatpush1.bf16.msra.mxu0 0
  %244 = vmatprep.subr.bf16.mxu0 0
  %245 = vmatpush1.bf16.msra.mxu0 0
  %246 = vmatprep.mubr.bf16.mxu0 0
  %247 = vmatmul.mubr.bf16.gmra.mrb[0].mxu0 %v212
  %v248 = vpop.f32.mrb[0].mxu0
  %v249 = vadd.f32 %v176, %v248
  %v250 = vpop.f32.mrb[0].mxu0
  %v251 = vpop.f32.mrb[0].mxu0
  %v252 = vadd.f32 %v179, %v251
  %v253 = vpop.f32.mrb[0].mxu0
  %254 = vdwg.mxu0
  %v255 = vld [vmem:[#allocation2] sm:$0x1e]
  %v256 = vld [vmem:[#allocation2 + $0x8] sm:$0x1e]
  %v259 = vunpack.c.l.b16 %v255
  %v260 = vunpack.c.h.b16 %v255
  %v261 = vunpack.c.l.b16 %v256
  %v262 = vunpack.c.h.b16 %v256
  %v263 = vpack.c.b16 %v259, %v259
  %v264 = vpack.c.b16 %v260, %v260
  %v265 = vpack.c.b16 %v261, %v261
  %v266 = vpack.c.b16 %v262, %v262
  %vm267 = vcmask 1042432
  %vm268 = vcmask 1046532
  %vm269 = vmor %vm267, %vm268
  %v270 = vrot.slane %v263, 5
  %v271 = vrot.slane %v270, 4
  %v272 = vrot.slane %v264, 5
  %v273 = vsel %vm269, %v271, %v272
  %v274 = vrot.slane %v265, 5
  %v275 = vrot.slane %v274, 4
  %v276 = vrot.slane %v266, 5
  %v277 = vsel %vm269, %v275, %v276
  %s278 = scalar_lea.vmem %s1, 64
  %v279 = vld [vmem:[%s278] sm:$0xf]
  %v280 = vld [vmem:[%s278 + $0x4] sm:$0xf]
  %v281 = vld [vmem:[%s278 + $0x8] sm:$0xf]
  %v282 = vld [vmem:[%s278 + $0xc] sm:$0xf]
  %v283 = vld [vmem:[%s278 + $0x10] sm:$0xf]
  %v284 = vld [vmem:[%s278 + $0x14] sm:$0xf]
  %v285 = vld [vmem:[%s278 + $0x18] sm:$0xf]
  %v286 = vld [vmem:[%s278 + $0x1c] sm:$0xf]
  %v287 = vunpack.c.l.b16 %v273
  %v288 = vunpack.c.l.b16 %v277
  %v289 = vpack.c.b16 %v288, %v287
  %v298 = vunpack.c.l.b16 %v279
  %v299 = vunpack.c.l.b16 %v280
  %v300 = vunpack.c.l.b16 %v281
  %v301 = vunpack.c.l.b16 %v282
  %v302 = vunpack.c.l.b16 %v283
  %v303 = vunpack.c.l.b16 %v284
  %v304 = vunpack.c.l.b16 %v285
  %v305 = vunpack.c.l.b16 %v286
  %v306 = vpack.c.b16 %v299, %v298
  %v307 = vpack.c.b16 %v301, %v300
  %v308 = vpack.c.b16 %v303, %v302
  %v309 = vpack.c.b16 %v305, %v304
  %v315 = vsel %vm33, %v289, 0
  %317 = vmatprep.subr.bf16.mxu0 0
  %318 = vmatpush1.bf16.msra.mxu0 %v306
  %319 = vmatprep.subr.bf16.mxu0 0
  %320 = vmatpush1.bf16.msra.mxu0 %v307
  %321 = vmatprep.subr.bf16.mxu0 0
  %322 = vmatpush1.bf16.msra.mxu0 %v308
  %323 = vmatprep.subr.bf16.mxu0 0
  %324 = vmatpush1.bf16.msra.mxu0 %v309
  %325 = vmatprep.subr.bf16.mxu0 0
  %326 = vmatpush1.bf16.msra.mxu0 0
  %327 = vmatprep.subr.bf16.mxu0 0
  %328 = vmatpush1.bf16.msra.mxu0 0
  %329 = vmatprep.subr.bf16.mxu0 0
  %330 = vmatpush1.bf16.msra.mxu0 0
  %331 = vmatprep.subr.bf16.mxu0 0
  %332 = vmatpush1.bf16.msra.mxu0 0
  %333 = vmatprep.subr.bf16.mxu0 0
  %334 = vmatpush1.bf16.msra.mxu0 0
  %335 = vmatprep.subr.bf16.mxu0 0
  %336 = vmatpush1.bf16.msra.mxu0 0
  %337 = vmatprep.subr.bf16.mxu0 0
  %338 = vmatpush1.bf16.msra.mxu0 0
  %339 = vmatprep.subr.bf16.mxu0 0
  %340 = vmatpush1.bf16.msra.mxu0 0
  %341 = vmatprep.subr.bf16.mxu0 0
  %342 = vmatpush1.bf16.msra.mxu0 0
  %343 = vmatprep.subr.bf16.mxu0 0
  %344 = vmatpush1.bf16.msra.mxu0 0
  %345 = vmatprep.subr.bf16.mxu0 0
  %346 = vmatpush1.bf16.msra.mxu0 0
  %347 = vmatprep.subr.bf16.mxu0 0
  %348 = vmatpush1.bf16.msra.mxu0 0
  %349 = vmatprep.mubr.bf16.mxu0 0
  %350 = vmatmul.mubr.bf16.gmra.mrb[0].mxu0 %v315
  %v351 = vpop.f32.mrb[0].mxu0
  %v352 = vadd.f32 0.0, %v351
  %v353 = vpop.f32.mrb[0].mxu0
  %v354 = vpop.f32.mrb[0].mxu0
  %v355 = vadd.f32 0.0, %v354
  %v356 = vpop.f32.mrb[0].mxu0
  %357 = vdwg.mxu0
  %v358 = vadd.f32 %v249, %v352
  %v359 = vadd.f32 %v252, %v355
  %v360 = vld [vmem:[#allocation2] sm:$0x3e]
  %v361 = vld [vmem:[#allocation2 + $0x8] sm:$0x3e]
  %v364 = vunpack.c.l.b16 %v360
  %v365 = vunpack.c.h.b16 %v360
  %v366 = vunpack.c.l.b16 %v361
  %v367 = vunpack.c.h.b16 %v361
  %v368 = vpack.c.b16 %v364, %v364
  %v369 = vpack.c.b16 %v365, %v365
  %v370 = vpack.c.b16 %v366, %v366
  %v371 = vpack.c.b16 %v367, %v367
  %vm372 = vsmask.f32 2304
  %vm373 = vsmask.f32 6416
  %vm374 = vmor %vm372, %vm373
  %v376 = vshrl.u32 %v368, 16
  %v378 = vrot.slane %v376, 5
  %v379 = vshll.u32 %v368, 16
  %v381 = vrot.slane %v379, 6
  %v382 = vor.u32 %v378, %v381
  %v383 = vrot.slane %v382, 4
  %v385 = vshrl.u32 %v369, 16
  %v387 = vrot.slane %v385, 5
  %v388 = vshll.u32 %v369, 16
  %v390 = vrot.slane %v388, 6
  %v391 = vor.u32 %v387, %v390
  %v392 = vsel %vm374, %v383, %v391
  %v394 = vshrl.u32 %v370, 16
  %v396 = vrot.slane %v394, 5
  %v397 = vshll.u32 %v370, 16
  %v399 = vrot.slane %v397, 6
  %v400 = vor.u32 %v396, %v399
  %v401 = vrot.slane %v400, 4
  %v403 = vshrl.u32 %v371, 16
  %v405 = vrot.slane %v403, 5
  %v406 = vshll.u32 %v371, 16
  %v408 = vrot.slane %v406, 6
  %v409 = vor.u32 %v405, %v408
  %v410 = vsel %vm374, %v401, %v409
  %s411 = scalar_lea.vmem %s1, 96
  %v412 = vld [vmem:[%s411] sm:$0xf]
  %v413 = vld [vmem:[%s411 + $0x4] sm:$0xf]
  %v414 = vld [vmem:[%s411 + $0x8] sm:$0xf]
  %v415 = vld [vmem:[%s411 + $0xc] sm:$0xf]
  %v416 = vld [vmem:[%s411 + $0x10] sm:$0xf]
  %v417 = vld [vmem:[%s411 + $0x14] sm:$0xf]
  %v418 = vld [vmem:[%s411 + $0x18] sm:$0xf]
  %v419 = vld [vmem:[%s411 + $0x1c] sm:$0xf]
  %v420 = vunpack.c.l.b16 %v392
  %v421 = vunpack.c.l.b16 %v410
  %v422 = vpack.c.b16 %v421, %v420
  %v431 = vunpack.c.l.b16 %v412
  %v432 = vunpack.c.l.b16 %v413
  %v433 = vunpack.c.l.b16 %v414
  %v434 = vunpack.c.l.b16 %v415
  %v435 = vunpack.c.l.b16 %v416
  %v436 = vunpack.c.l.b16 %v417
  %v437 = vunpack.c.l.b16 %v418
  %v438 = vunpack.c.l.b16 %v419
  %v439 = vpack.c.b16 %v432, %v431
  %v440 = vpack.c.b16 %v434, %v433
  %v441 = vpack.c.b16 %v436, %v435
  %v442 = vpack.c.b16 %v438, %v437
  %v448 = vsel %vm33, %v422, 0
  %450 = vmatprep.subr.bf16.mxu0 0
  %451 = vmatpush1.bf16.msra.mxu0 %v439
  %452 = vmatprep.subr.bf16.mxu0 0
  %453 = vmatpush1.bf16.msra.mxu0 %v440
  %454 = vmatprep.subr.bf16.mxu0 0
  %455 = vmatpush1.bf16.msra.mxu0 %v441
  %456 = vmatprep.subr.bf16.mxu0 0
  %457 = vmatpush1.bf16.msra.mxu0 %v442
  %458 = vmatprep.subr.bf16.mxu0 0
  %459 = vmatpush1.bf16.msra.mxu0 0
  %460 = vmatprep.subr.bf16.mxu0 0
  %461 = vmatpush1.bf16.msra.mxu0 0
  %462 = vmatprep.subr.bf16.mxu0 0
  %463 = vmatpush1.bf16.msra.mxu0 0
  %464 = vmatprep.subr.bf16.mxu0 0
  %465 = vmatpush1.bf16.msra.mxu0 0
  %466 = vmatprep.subr.bf16.mxu0 0
  %467 = vmatpush1.bf16.msra.mxu0 0
  %468 = vmatprep.subr.bf16.mxu0 0
  %469 = vmatpush1.bf16.msra.mxu0 0
  %470 = vmatprep.subr.bf16.mxu0 0
  %471 = vmatpush1.bf16.msra.mxu0 0
  %472 = vmatprep.subr.bf16.mxu0 0
  %473 = vmatpush1.bf16.msra.mxu0 0
  %474 = vmatprep.subr.bf16.mxu0 0
  %475 = vmatpush1.bf16.msra.mxu0 0
  %476 = vmatprep.subr.bf16.mxu0 0
  %477 = vmatpush1.bf16.msra.mxu0 0
  %478 = vmatprep.subr.bf16.mxu0 0
  %479 = vmatpush1.bf16.msra.mxu0 0
  %480 = vmatprep.subr.bf16.mxu0 0
  %481 = vmatpush1.bf16.msra.mxu0 0
  %482 = vmatprep.mubr.bf16.mxu0 0
  %483 = vmatmul.mubr.bf16.gmra.mrb[0].mxu0 %v448
  %v484 = vpop.f32.mrb[0].mxu0
  %v485 = vadd.f32 0.0, %v484
  %v486 = vpop.f32.mrb[0].mxu0
  %v487 = vpop.f32.mrb[0].mxu0
  %v488 = vadd.f32 0.0, %v487
  %v489 = vpop.f32.mrb[0].mxu0
  %490 = vdwg.mxu0
  %v491 = vadd.f32 %v358, %v485
  %v492 = vadd.f32 %v359, %v488
  %v493 = vld [vmem:[%s2] sm:$0x1]
  %v495 = vlaneseq
  %v496 = vshrl.u32 %v495, 7
  %v497 = vsub.s32 0, %v496
  %v498 = vrot.slane %v493, %v497
  %v500 = vadd.f32 %v491, %v498
  %v501 = vadd.f32 %v492, %v498
  %v502 = vmax.f32 %v500, 0.0
  %v503 = vmax.f32 %v501, 0.0
  %v506 = vcombine.high %v502, %v502
  %v508 = vunpack.c.l.s4 1966171168
  %v509 = vunpack.c.0.s8 %v508
  %v510 = vlaneseq
  %v511 = vshrl.u32 %v510, 7
  %v512 = vsub.s32 %v509, %v511
  %v513 = vrot.slane %v502, %v512
  %v515 = vunpack.c.l.s4 1966171168
  %v516 = vunpack.c.0.s8 %v515
  %v517 = vlaneseq
  %v518 = vshrl.u32 %v517, 7
  %v519 = vsub.s32 %v516, %v518
  %v520 = vrot.slane %v506, %v519
  %v521 = vcombine.high %v513, %v513
  %v522 = vcombine.high %v520, %v520
  %v524 = vunpack.c.l.s4 1966171168
  %v525 = vunpack.c.0.s8 %v524
  %v526 = vlaneseq
  %v527 = vshrl.u32 %v526, 7
  %v528 = vsub.s32 %v525, %v527
  %v529 = vrot.slane %v513, %v528
  %v531 = vunpack.c.l.s4 1966171168
  %v532 = vunpack.c.0.s8 %v531
  %v533 = vlaneseq
  %v534 = vshrl.u32 %v533, 7
  %v535 = vsub.s32 %v532, %v534
  %v536 = vrot.slane %v520, %v535
  %v538 = vunpack.c.l.s4 1966171168
  %v539 = vunpack.c.0.s8 %v538
  %v540 = vlaneseq
  %v541 = vshrl.u32 %v540, 7
  %v542 = vsub.s32 %v539, %v541
  %v543 = vrot.slane %v521, %v542
  %v545 = vunpack.c.l.s4 1966171168
  %v546 = vunpack.c.0.s8 %v545
  %v547 = vlaneseq
  %v548 = vshrl.u32 %v547, 7
  %v549 = vsub.s32 %v546, %v548
  %v550 = vrot.slane %v522, %v549
  %v551 = vcombine.high %v529, %v529
  %v552 = vcombine.high %v536, %v536
  %v553 = vcombine.high %v543, %v543
  %v554 = vcombine.high %v550, %v550
  %v555 = vcombine.high %v503, %v503
  %v557 = vunpack.c.l.s4 1966171168
  %v558 = vunpack.c.0.s8 %v557
  %v559 = vlaneseq
  %v560 = vshrl.u32 %v559, 7
  %v561 = vsub.s32 %v558, %v560
  %v562 = vrot.slane %v503, %v561
  %v564 = vunpack.c.l.s4 1966171168
  %v565 = vunpack.c.0.s8 %v564
  %v566 = vlaneseq
  %v567 = vshrl.u32 %v566, 7
  %v568 = vsub.s32 %v565, %v567
  %v569 = vrot.slane %v555, %v568
  %v570 = vcombine.high %v562, %v562
  %v571 = vcombine.high %v569, %v569
  %v573 = vunpack.c.l.s4 1966171168
  %v574 = vunpack.c.0.s8 %v573
  %v575 = vlaneseq
  %v576 = vshrl.u32 %v575, 7
  %v577 = vsub.s32 %v574, %v576
  %v578 = vrot.slane %v562, %v577
  %v580 = vunpack.c.l.s4 1966171168
  %v581 = vunpack.c.0.s8 %v580
  %v582 = vlaneseq
  %v583 = vshrl.u32 %v582, 7
  %v584 = vsub.s32 %v581, %v583
  %v585 = vrot.slane %v569, %v584
  %v587 = vunpack.c.l.s4 1966171168
  %v588 = vunpack.c.0.s8 %v587
  %v589 = vlaneseq
  %v590 = vshrl.u32 %v589, 7
  %v591 = vsub.s32 %v588, %v590
  %v592 = vrot.slane %v570, %v591
  %v594 = vunpack.c.l.s4 1966171168
  %v595 = vunpack.c.0.s8 %v594
  %v596 = vlaneseq
  %v597 = vshrl.u32 %v596, 7
  %v598 = vsub.s32 %v595, %v597
  %v599 = vrot.slane %v571, %v598
  %v600 = vcombine.high %v578, %v578
  %v601 = vcombine.high %v585, %v585
  %v602 = vcombine.high %v592, %v592
  %v603 = vcombine.high %v599, %v599
  %v604 = vlaneseq
  %v605 = vshrl.u32 %v604, 7
  %v606 = vsub.s32 0, %v605
  %v607 = vrot.slane %v529, %v606
  %v608 = vlaneseq
  %v609 = vshrl.u32 %v608, 7
  %v610 = vsub.s32 0, %v609
  %v611 = vrot.slane %v543, %v610
  %v612 = vlaneseq
  %v613 = vshrl.u32 %v612, 7
  %v614 = vsub.s32 0, %v613
  %v615 = vrot.slane %v551, %v614
  %v616 = vlaneseq
  %v617 = vshrl.u32 %v616, 7
  %v618 = vsub.s32 0, %v617
  %v619 = vrot.slane %v553, %v618
  %v620 = vlaneseq
  %v621 = vshrl.u32 %v620, 7
  %v622 = vsub.s32 0, %v621
  %v623 = vrot.slane %v536, %v622
  %v624 = vlaneseq
  %v625 = vshrl.u32 %v624, 7
  %v626 = vsub.s32 0, %v625
  %v627 = vrot.slane %v550, %v626
  %v628 = vlaneseq
  %v629 = vshrl.u32 %v628, 7
  %v630 = vsub.s32 0, %v629
  %v631 = vrot.slane %v552, %v630
  %v632 = vlaneseq
  %v633 = vshrl.u32 %v632, 7
  %v634 = vsub.s32 0, %v633
  %v635 = vrot.slane %v554, %v634
  %v636 = vlaneseq
  %v637 = vshrl.u32 %v636, 7
  %v638 = vsub.s32 0, %v637
  %v639 = vrot.slane %v578, %v638
  %v640 = vlaneseq
  %v641 = vshrl.u32 %v640, 7
  %v642 = vsub.s32 0, %v641
  %v643 = vrot.slane %v592, %v642
  %v644 = vlaneseq
  %v645 = vshrl.u32 %v644, 7
  %v646 = vsub.s32 0, %v645
  %v647 = vrot.slane %v600, %v646
  %v648 = vlaneseq
  %v649 = vshrl.u32 %v648, 7
  %v650 = vsub.s32 0, %v649
  %v651 = vrot.slane %v602, %v650
  %v652 = vlaneseq
  %v653 = vshrl.u32 %v652, 7
  %v654 = vsub.s32 0, %v653
  %v655 = vrot.slane %v585, %v654
  %v656 = vlaneseq
  %v657 = vshrl.u32 %v656, 7
  %v658 = vsub.s32 0, %v657
  %v659 = vrot.slane %v599, %v658
  %v660 = vlaneseq
  %v661 = vshrl.u32 %v660, 7
  %v662 = vsub.s32 0, %v661
  %v663 = vrot.slane %v601, %v662
  %v664 = vlaneseq
  %v665 = vshrl.u32 %v664, 7
  %v666 = vsub.s32 0, %v665
  %v667 = vrot.slane %v603, %v666
  %v668 = vcombine.low %v607, %v611
  %v669 = vcombine.low %v615, %v619
  %v671 = vunpack.c.l.s4 1983009808
  %v672 = vunpack.c.0.s8 %v671
  %v673 = vlaneseq
  %v674 = vshrl.u32 %v673, 7
  %v675 = vsub.s32 %v672, %v674
  %v676 = vrot.slane %v668, %v675
  %v678 = vunpack.c.l.s4 1983009808
  %v679 = vunpack.c.0.s8 %v678
  %v680 = vlaneseq
  %v681 = vshrl.u32 %v680, 7
  %v682 = vsub.s32 %v679, %v681
  %v683 = vrot.slane %v669, %v682
  %v684 = vcombine.low %v676, %v683
  %v685 = vcombine.low %v623, %v627
  %v686 = vcombine.low %v631, %v635
  %v688 = vunpack.c.l.s4 1983009808
  %v689 = vunpack.c.0.s8 %v688
  %v690 = vlaneseq
  %v691 = vshrl.u32 %v690, 7
  %v692 = vsub.s32 %v689, %v691
  %v693 = vrot.slane %v685, %v692
  %v695 = vunpack.c.l.s4 1983009808
  %v696 = vunpack.c.0.s8 %v695
  %v697 = vlaneseq
  %v698 = vshrl.u32 %v697, 7
  %v699 = vsub.s32 %v696, %v698
  %v700 = vrot.slane %v686, %v699
  %v701 = vcombine.low %v693, %v700
  %v702 = vcombine.low %v639, %v643
  %v703 = vcombine.low %v647, %v651
  %v705 = vunpack.c.l.s4 1983009808
  %v706 = vunpack.c.0.s8 %v705
  %v707 = vlaneseq
  %v708 = vshrl.u32 %v707, 7
  %v709 = vsub.s32 %v706, %v708
  %v710 = vrot.slane %v702, %v709
  %v712 = vunpack.c.l.s4 1983009808
  %v713 = vunpack.c.0.s8 %v712
  %v714 = vlaneseq
  %v715 = vshrl.u32 %v714, 7
  %v716 = vsub.s32 %v713, %v715
  %v717 = vrot.slane %v703, %v716
  %v718 = vcombine.low %v710, %v717
  %v719 = vcombine.low %v655, %v659
  %v720 = vcombine.low %v663, %v667
  %v722 = vunpack.c.l.s4 1983009808
  %v723 = vunpack.c.0.s8 %v722
  %v724 = vlaneseq
  %v725 = vshrl.u32 %v724, 7
  %v726 = vsub.s32 %v723, %v725
  %v727 = vrot.slane %v719, %v726
  %v729 = vunpack.c.l.s4 1983009808
  %v730 = vunpack.c.0.s8 %v729
  %v731 = vlaneseq
  %v732 = vshrl.u32 %v731, 7
  %v733 = vsub.s32 %v730, %v732
  %v734 = vrot.slane %v720, %v733
  %v735 = vcombine.low %v727, %v734
  %v740 = vpack.c.bf16 %v701, %v684
  %v741 = vpack.c.bf16 %v735, %v718
  %742 = vst [vmem:[#allocation3] sm:$0xf] 0
  %743 = vst [vmem:[#allocation3 + $0x4] sm:$0xf] 0
  %744 = vst [vmem:[#allocation3 + $0x8] sm:$0xf] 0
  %745 = vst [vmem:[#allocation3 + $0xc] sm:$0xf] 0
  %746 = vst [vmem:[#allocation3 + $0x10] sm:$0xf] 0
  %747 = vst [vmem:[#allocation3 + $0x14] sm:$0xf] 0
  %v750 = vunpack.c.l.b16 %v740
  %v751 = vunpack.c.h.b16 %v740
  %v752 = vunpack.c.l.b16 %v741
  %v753 = vunpack.c.h.b16 %v741
  %v754 = vpack.c.b16 %v750, %v750
  %v755 = vpack.c.b16 %v751, %v751
  %v756 = vpack.c.b16 %v752, %v752
  %v757 = vpack.c.b16 %v753, %v753
  %vm758 = vcmask 1040384
  %vm759 = vcmask 1044484
  %vm760 = vmor %vm758, %vm759
  %v761 = vrot.slane %v754, 7
  %v762 = vrot.slane %v761, 4
  %v763 = vrot.slane %v755, 7
  %v764 = vsel %vm760, %v762, %v763
  %v765 = vrot.slane %v763, 4
  %v766 = vrot.slane %v756, 7
  %v767 = vrot.slane %v766, 4
  %v768 = vrot.slane %v757, 7
  %v769 = vsel %vm760, %v767, %v768
  %v770 = vrot.slane %v768, 4
  %777 = vst [vmem:[#allocation3] sm:$0xe] %v761
  %778 = vst [vmem:[#allocation3 + $0x4] sm:$0xf] %v764
  %779 = vst [vmem:[#allocation3 + $0x8] sm:$0x1] %v765
  %780 = vst [vmem:[#allocation3 + $0xc] sm:$0xe] %v766
  %781 = vst [vmem:[#allocation3 + $0x10] sm:$0xf] %v769
  %782 = vst [vmem:[#allocation3 + $0x14] sm:$0x1] %v770
  %v783 = vld [vmem:[#allocation3] sm:$0xf]
  %v784 = vld [vmem:[#allocation3 + $0x4] sm:$0xf]
  %v785 = vld [vmem:[#allocation3 + $0xc] sm:$0xf]
  %v786 = vld [vmem:[#allocation3 + $0x10] sm:$0xf]
  %v787 = vld [vmem:[%s3] sm:$0xf]
  %v788 = vld [vmem:[%s3 + $0x4] sm:$0xf]
  %v789 = vld [vmem:[%s3 + $0x8] sm:$0xf]
  %v790 = vld [vmem:[%s3 + $0xc] sm:$0xf]
  %v791 = vld [vmem:[%s3 + $0x10] sm:$0xf]
  %v792 = vld [vmem:[%s3 + $0x14] sm:$0xf]
  %v793 = vld [vmem:[%s3 + $0x18] sm:$0xf]
  %v794 = vld [vmem:[%s3 + $0x1c] sm:$0xf]
  %v795 = vld [vmem:[%s3 + $0x20] sm:$0xf]
  %v796 = vld [vmem:[%s3 + $0x24] sm:$0xf]
  %v797 = vld [vmem:[%s3 + $0x28] sm:$0xf]
  %v798 = vld [vmem:[%s3 + $0x2c] sm:$0xf]
  %v799 = vld [vmem:[%s3 + $0x30] sm:$0xf]
  %v800 = vld [vmem:[%s3 + $0x34] sm:$0xf]
  %v801 = vld [vmem:[%s3 + $0x38] sm:$0xf]
  %v802 = vld [vmem:[%s3 + $0x3c] sm:$0xf]
  %v803 = vld [vmem:[#allocation3] sm:$0xf]
  %v804 = vld [vmem:[#allocation3 + $0x4] sm:$0xf]
  %v805 = vld [vmem:[#allocation3 + $0x8] sm:$0x1]
  %v806 = vld [vmem:[#allocation3 + $0xc] sm:$0xf]
  %v807 = vld [vmem:[#allocation3 + $0x10] sm:$0xf]
  %v808 = vld [vmem:[#allocation3 + $0x14] sm:$0x1]
  %v810 = vshrl.u32 %v803, 16
  %v812 = vrot.slane %v810, 4
  %v813 = vshll.u32 %v803, 16
  %v815 = vrot.slane %v813, 5
  %v816 = vor.u32 %v812, %v815
  %v817 = vrot.slane %v816, 4
  %v819 = vshll.u32 %v804, 16
  %v821 = vrot.slane %v819, 5
  %v822 = vsel %vm73, %v817, %v821
  %v823 = vshrl.u32 %v804, 16
  %v825 = vrot.slane %v823, 4
  %v826 = vor.u32 %v825, %v821
  %v827 = vrot.slane %v826, 4
  %v829 = vshll.u32 %v805, 16
  %v831 = vrot.slane %v829, 5
  %v832 = vsel %vm73, %v827, %v831
  %v834 = vshrl.u32 %v806, 16
  %v836 = vrot.slane %v834, 4
  %v837 = vshll.u32 %v806, 16
  %v839 = vrot.slane %v837, 5
  %v840 = vor.u32 %v836, %v839
  %v841 = vrot.slane %v840, 4
  %v843 = vshll.u32 %v807, 16
  %v845 = vrot.slane %v843, 5
  %v846 = vsel %vm73, %v841, %v845
  %v847 = vshrl.u32 %v807, 16
  %v849 = vrot.slane %v847, 4
  %v850 = vor.u32 %v849, %v845
  %v851 = vrot.slane %v850, 4
  %v853 = vshll.u32 %v808, 16
  %v855 = vrot.slane %v853, 5
  %v856 = vsel %vm73, %v851, %v855
  %s857 = scalar_lea.vmem %s3, 64
  %v858 = vld [vmem:[%s857] sm:$0xf]
  %v859 = vld [vmem:[%s857 + $0x4] sm:$0xf]
  %v860 = vld [vmem:[%s857 + $0x8] sm:$0xf]
  %v861 = vld [vmem:[%s857 + $0xc] sm:$0xf]
  %v862 = vld [vmem:[%s857 + $0x10] sm:$0xf]
  %v863 = vld [vmem:[%s857 + $0x14] sm:$0xf]
  %v864 = vld [vmem:[%s857 + $0x18] sm:$0xf]
  %v865 = vld [vmem:[%s857 + $0x1c] sm:$0xf]
  %v866 = vld [vmem:[%s857 + $0x20] sm:$0xf]
  %v867 = vld [vmem:[%s857 + $0x24] sm:$0xf]
  %v868 = vld [vmem:[%s857 + $0x28] sm:$0xf]
  %v869 = vld [vmem:[%s857 + $0x2c] sm:$0xf]
  %v870 = vld [vmem:[%s857 + $0x30] sm:$0xf]
  %v871 = vld [vmem:[%s857 + $0x34] sm:$0xf]
  %v872 = vld [vmem:[%s857 + $0x38] sm:$0xf]
  %v873 = vld [vmem:[%s857 + $0x3c] sm:$0xf]
  %v874 = vunpack.c.l.b16 %v822
  %v875 = vunpack.c.l.b16 %v832
  %v876 = vunpack.c.l.b16 %v846
  %v877 = vunpack.c.l.b16 %v856
  %v878 = vpack.c.b16 %v875, %v874
  %v879 = vpack.c.b16 %v877, %v876
  %v898 = vunpack.c.l.b16 %v858
  %v899 = vunpack.c.l.b16 %v859
  %v900 = vunpack.c.l.b16 %v860
  %v901 = vunpack.c.l.b16 %v861
  %v902 = vunpack.c.l.b16 %v862
  %v903 = vunpack.c.l.b16 %v863
  %v904 = vunpack.c.l.b16 %v864
  %v905 = vunpack.c.l.b16 %v865
  %v906 = vunpack.c.l.b16 %v866
  %v907 = vunpack.c.l.b16 %v867
  %v908 = vunpack.c.l.b16 %v868
  %v909 = vunpack.c.l.b16 %v869
  %v910 = vunpack.c.l.b16 %v870
  %v911 = vunpack.c.l.b16 %v871
  %v912 = vunpack.c.l.b16 %v872
  %v913 = vunpack.c.l.b16 %v873
  %v914 = vpack.c.b16 %v899, %v898
  %v915 = vpack.c.b16 %v901, %v900
  %v916 = vpack.c.b16 %v903, %v902
  %v917 = vpack.c.b16 %v905, %v904
  %v918 = vpack.c.b16 %v907, %v906
  %v919 = vpack.c.b16 %v909, %v908
  %v920 = vpack.c.b16 %v911, %v910
  %v921 = vpack.c.b16 %v913, %v912
  %930 = vmatprep.subr.bf16.mxu0 0
  %931 = vmatpush1.bf16.msra.mxu0 %v914
  %932 = vmatprep.subr.bf16.mxu0 0
  %933 = vmatpush1.bf16.msra.mxu0 %v915
  %934 = vmatprep.subr.bf16.mxu0 0
  %935 = vmatpush1.bf16.msra.mxu0 %v916
  %936 = vmatprep.subr.bf16.mxu0 0
  %937 = vmatpush1.bf16.msra.mxu0 %v917
  %938 = vmatprep.subr.bf16.mxu0 0
  %939 = vmatpush1.bf16.msra.mxu0 %v918
  %940 = vmatprep.subr.bf16.mxu0 0
  %941 = vmatpush1.bf16.msra.mxu0 %v919
  %942 = vmatprep.subr.bf16.mxu0 0
  %943 = vmatpush1.bf16.msra.mxu0 %v920
  %944 = vmatprep.subr.bf16.mxu0 0
  %945 = vmatpush1.bf16.msra.mxu0 %v921
  %946 = vmatprep.subr.bf16.mxu0 0
  %947 = vmatpush1.bf16.msra.mxu0 0
  %948 = vmatprep.subr.bf16.mxu0 0
  %949 = vmatpush1.bf16.msra.mxu0 0
  %950 = vmatprep.subr.bf16.mxu0 0
  %951 = vmatpush1.bf16.msra.mxu0 0
  %952 = vmatprep.subr.bf16.mxu0 0
  %953 = vmatpush1.bf16.msra.mxu0 0
  %954 = vmatprep.subr.bf16.mxu0 0
  %955 = vmatpush1.bf16.msra.mxu0 0
  %956 = vmatprep.subr.bf16.mxu0 0
  %957 = vmatpush1.bf16.msra.mxu0 0
  %958 = vmatprep.subr.bf16.mxu0 0
  %959 = vmatpush1.bf16.msra.mxu0 0
  %960 = vmatprep.subr.bf16.mxu0 0
  %961 = vmatpush1.bf16.msra.mxu0 0
  %962 = vmatprep.mubr.bf16.mxu0 0
  %963 = vmatmul.mubr.bf16.gmra.mrb[0].mxu0 %v878
  %v964 = vpop.f32.mrb[0].mxu0
  %v965 = vadd.f32 0.0, %v964
  %v966 = vpop.f32.mrb[0].mxu0
  %v967 = vpop.f32.mrb[0].mxu0
  %v968 = vadd.f32 0.0, %v967
  %v969 = vpop.f32.mrb[0].mxu0
  %970 = vmatprep.mubr.bf16.mxu0 0
  %971 = vmatmul.mubr.bf16.gmra.mrb[0].mxu0 %v879
  %v972 = vpop.f32.mrb[0].mxu0
  %v973 = vadd.f32 0.0, %v972
  %v974 = vpop.f32.mrb[0].mxu0
  %v975 = vpop.f32.mrb[0].mxu0
  %v976 = vadd.f32 0.0, %v975
  %v977 = vpop.f32.mrb[0].mxu0
  %978 = vdwg.mxu0
  %v983 = vunpack.c.l.b16 %v783
  %v984 = vunpack.c.l.b16 %v784
  %v985 = vunpack.c.l.b16 %v785
  %v986 = vunpack.c.l.b16 %v786
  %v987 = vpack.c.b16 %v984, %v983
  %v988 = vpack.c.b16 %v986, %v985
  %v1007 = vunpack.c.l.b16 %v787
  %v1008 = vunpack.c.l.b16 %v788
  %v1009 = vunpack.c.l.b16 %v789
  %v1010 = vunpack.c.l.b16 %v790
  %v1011 = vunpack.c.l.b16 %v791
  %v1012 = vunpack.c.l.b16 %v792
  %v1013 = vunpack.c.l.b16 %v793
  %v1014 = vunpack.c.l.b16 %v794
  %v1015 = vunpack.c.l.b16 %v795
  %v1016 = vunpack.c.l.b16 %v796
  %v1017 = vunpack.c.l.b16 %v797
  %v1018 = vunpack.c.l.b16 %v798
  %v1019 = vunpack.c.l.b16 %v799
  %v1020 = vunpack.c.l.b16 %v800
  %v1021 = vunpack.c.l.b16 %v801
  %v1022 = vunpack.c.l.b16 %v802
  %v1023 = vpack.c.b16 %v1008, %v1007
  %v1024 = vpack.c.b16 %v1010, %v1009
  %v1025 = vpack.c.b16 %v1012, %v1011
  %v1026 = vpack.c.b16 %v1014, %v1013
  %v1027 = vpack.c.b16 %v1016, %v1015
  %v1028 = vpack.c.b16 %v1018, %v1017
  %v1029 = vpack.c.b16 %v1020, %v1019
  %v1030 = vpack.c.b16 %v1022, %v1021
  %1039 = vmatprep.subr.bf16.mxu0 0
  %1040 = vmatpush1.bf16.msra.mxu0 %v1023
  %1041 = vmatprep.subr.bf16.mxu0 0
  %1042 = vmatpush1.bf16.msra.mxu0 %v1024
  %1043 = vmatprep.subr.bf16.mxu0 0
  %1044 = vmatpush1.bf16.msra.mxu0 %v1025
  %1045 = vmatprep.subr.bf16.mxu0 0
  %1046 = vmatpush1.bf16.msra.mxu0 %v1026
  %1047 = vmatprep.subr.bf16.mxu0 0
  %1048 = vmatpush1.bf16.msra.mxu0 %v1027
  %1049 = vmatprep.subr.bf16.mxu0 0
  %1050 = vmatpush1.bf16.msra.mxu0 %v1028
  %1051 = vmatprep.subr.bf16.mxu0 0
  %1052 = vmatpush1.bf16.msra.mxu0 %v1029
  %1053 = vmatprep.subr.bf16.mxu0 0
  %1054 = vmatpush1.bf16.msra.mxu0 %v1030
  %1055 = vmatprep.subr.bf16.mxu0 0
  %1056 = vmatpush1.bf16.msra.mxu0 0
  %1057 = vmatprep.subr.bf16.mxu0 0
  %1058 = vmatpush1.bf16.msra.mxu0 0
  %1059 = vmatprep.subr.bf16.mxu0 0
  %1060 = vmatpush1.bf16.msra.mxu0 0
  %1061 = vmatprep.subr.bf16.mxu0 0
  %1062 = vmatpush1.bf16.msra.mxu0 0
  %1063 = vmatprep.subr.bf16.mxu0 0
  %1064 = vmatpush1.bf16.msra.mxu0 0
  %1065 = vmatprep.subr.bf16.mxu0 0
  %1066 = vmatpush1.bf16.msra.mxu0 0
  %1067 = vmatprep.subr.bf16.mxu0 0
  %1068 = vmatpush1.bf16.msra.mxu0 0
  %1069 = vmatprep.subr.bf16.mxu0 0
  %1070 = vmatpush1.bf16.msra.mxu0 0
  %1071 = vmatprep.mubr.bf16.mxu0 0
  %1072 = vmatmul.mubr.bf16.gmra.mrb[0].mxu0 %v987
  %v1073 = vpop.f32.mrb[0].mxu0
  %v1074 = vadd.f32 %v965, %v1073
  %v1075 = vpop.f32.mrb[0].mxu0
  %v1076 = vpop.f32.mrb[0].mxu0
  %v1077 = vadd.f32 %v968, %v1076
  %v1078 = vpop.f32.mrb[0].mxu0
  %1079 = vmatprep.mubr.bf16.mxu0 0
  %1080 = vmatmul.mubr.bf16.gmra.mrb[0].mxu0 %v988
  %v1081 = vpop.f32.mrb[0].mxu0
  %v1082 = vadd.f32 %v973, %v1081
  %v1083 = vpop.f32.mrb[0].mxu0
  %v1084 = vpop.f32.mrb[0].mxu0
  %v1085 = vadd.f32 %v976, %v1084
  %v1086 = vpop.f32.mrb[0].mxu0
  %1087 = vdwg.mxu0
  %v1088 = vld [vmem:[#allocation3] sm:$0xe]
  %v1089 = vld [vmem:[#allocation3 + $0xc] sm:$0xe]
  %v1096 = vrot.slane %v1088, 5
  %v1097 = vrot.slane %v1096, 4
  %v1098 = vrot.slane %v804, 5
  %v1099 = vsel %vm269, %v1097, %v1098
  %v1100 = vrot.slane %v1098, 4
  %v1101 = vrot.slane %v805, 5
  %v1102 = vsel %vm269, %v1100, %v1101
  %v1103 = vrot.slane %v1089, 5
  %v1104 = vrot.slane %v1103, 4
  %v1105 = vrot.slane %v807, 5
  %v1106 = vsel %vm269, %v1104, %v1105
  %v1107 = vrot.slane %v1105, 4
  %v1108 = vrot.slane %v808, 5
  %v1109 = vsel %vm269, %v1107, %v1108
  %s1110 = scalar_lea.vmem %s3, 128
  %v1111 = vld [vmem:[%s1110] sm:$0xf]
  %v1112 = vld [vmem:[%s1110 + $0x4] sm:$0xf]
  %v1113 = vld [vmem:[%s1110 + $0x8] sm:$0xf]
  %v1114 = vld [vmem:[%s1110 + $0xc] sm:$0xf]
  %v1115 = vld [vmem:[%s1110 + $0x10] sm:$0xf]
  %v1116 = vld [vmem:[%s1110 + $0x14] sm:$0xf]
  %v1117 = vld [vmem:[%s1110 + $0x18] sm:$0xf]
  %v1118 = vld [vmem:[%s1110 + $0x1c] sm:$0xf]
  %v1119 = vld [vmem:[%s1110 + $0x20] sm:$0xf]
  %v1120 = vld [vmem:[%s1110 + $0x24] sm:$0xf]
  %v1121 = vld [vmem:[%s1110 + $0x28] sm:$0xf]
  %v1122 = vld [vmem:[%s1110 + $0x2c] sm:$0xf]
  %v1123 = vld [vmem:[%s1110 + $0x30] sm:$0xf]
  %v1124 = vld [vmem:[%s1110 + $0x34] sm:$0xf]
  %v1125 = vld [vmem:[%s1110 + $0x38] sm:$0xf]
  %v1126 = vld [vmem:[%s1110 + $0x3c] sm:$0xf]
  %v1127 = vunpack.c.l.b16 %v1099
  %v1128 = vunpack.c.l.b16 %v1102
  %v1129 = vunpack.c.l.b16 %v1106
  %v1130 = vunpack.c.l.b16 %v1109
  %v1131 = vpack.c.b16 %v1128, %v1127
  %v1132 = vpack.c.b16 %v1130, %v1129
  %v1151 = vunpack.c.l.b16 %v1111
  %v1152 = vunpack.c.l.b16 %v1112
  %v1153 = vunpack.c.l.b16 %v1113
  %v1154 = vunpack.c.l.b16 %v1114
  %v1155 = vunpack.c.l.b16 %v1115
  %v1156 = vunpack.c.l.b16 %v1116
  %v1157 = vunpack.c.l.b16 %v1117
  %v1158 = vunpack.c.l.b16 %v1118
  %v1159 = vunpack.c.l.b16 %v1119
  %v1160 = vunpack.c.l.b16 %v1120
  %v1161 = vunpack.c.l.b16 %v1121
  %v1162 = vunpack.c.l.b16 %v1122
  %v1163 = vunpack.c.l.b16 %v1123
  %v1164 = vunpack.c.l.b16 %v1124
  %v1165 = vunpack.c.l.b16 %v1125
  %v1166 = vunpack.c.l.b16 %v1126
  %v1167 = vpack.c.b16 %v1152, %v1151
  %v1168 = vpack.c.b16 %v1154, %v1153
  %v1169 = vpack.c.b16 %v1156, %v1155
  %v1170 = vpack.c.b16 %v1158, %v1157
  %v1171 = vpack.c.b16 %v1160, %v1159
  %v1172 = vpack.c.b16 %v1162, %v1161
  %v1173 = vpack.c.b16 %v1164, %v1163
  %v1174 = vpack.c.b16 %v1166, %v1165
  %1183 = vmatprep.subr.bf16.mxu0 0
  %1184 = vmatpush1.bf16.msra.mxu0 %v1167
  %1185 = vmatprep.subr.bf16.mxu0 0
  %1186 = vmatpush1.bf16.msra.mxu0 %v1168
  %1187 = vmatprep.subr.bf16.mxu0 0
  %1188 = vmatpush1.bf16.msra.mxu0 %v1169
  %1189 = vmatprep.subr.bf16.mxu0 0
  %1190 = vmatpush1.bf16.msra.mxu0 %v1170
  %1191 = vmatprep.subr.bf16.mxu0 0
  %1192 = vmatpush1.bf16.msra.mxu0 %v1171
  %1193 = vmatprep.subr.bf16.mxu0 0
  %1194 = vmatpush1.bf16.msra.mxu0 %v1172
  %1195 = vmatprep.subr.bf16.mxu0 0
  %1196 = vmatpush1.bf16.msra.mxu0 %v1173
  %1197 = vmatprep.subr.bf16.mxu0 0
  %1198 = vmatpush1.bf16.msra.mxu0 %v1174
  %1199 = vmatprep.subr.bf16.mxu0 0
  %1200 = vmatpush1.bf16.msra.mxu0 0
  %1201 = vmatprep.subr.bf16.mxu0 0
  %1202 = vmatpush1.bf16.msra.mxu0 0
  %1203 = vmatprep.subr.bf16.mxu0 0
  %1204 = vmatpush1.bf16.msra.mxu0 0
  %1205 = vmatprep.subr.bf16.mxu0 0
  %1206 = vmatpush1.bf16.msra.mxu0 0
  %1207 = vmatprep.subr.bf16.mxu0 0
  %1208 = vmatpush1.bf16.msra.mxu0 0
  %1209 = vmatprep.subr.bf16.mxu0 0
  %1210 = vmatpush1.bf16.msra.mxu0 0
  %1211 = vmatprep.subr.bf16.mxu0 0
  %1212 = vmatpush1.bf16.msra.mxu0 0
  %1213 = vmatprep.subr.bf16.mxu0 0
  %1214 = vmatpush1.bf16.msra.mxu0 0
  %1215 = vmatprep.mubr.bf16.mxu0 0
  %1216 = vmatmul.mubr.bf16.gmra.mrb[0].mxu0 %v1131
  %v1217 = vpop.f32.mrb[0].mxu0
  %v1218 = vadd.f32 0.0, %v1217
  %v1219 = vpop.f32.mrb[0].mxu0
  %v1220 = vpop.f32.mrb[0].mxu0
  %v1221 = vadd.f32 0.0, %v1220
  %v1222 = vpop.f32.mrb[0].mxu0
  %1223 = vmatprep.mubr.bf16.mxu0 0
  %1224 = vmatmul.mubr.bf16.gmra.mrb[0].mxu0 %v1132
  %v1225 = vpop.f32.mrb[0].mxu0
  %v1226 = vadd.f32 0.0, %v1225
  %v1227 = vpop.f32.mrb[0].mxu0
  %v1228 = vpop.f32.mrb[0].mxu0
  %v1229 = vadd.f32 0.0, %v1228
  %v1230 = vpop.f32.mrb[0].mxu0
  %1231 = vdwg.mxu0
  %v1232 = vadd.f32 %v1074, %v1218
  %v1233 = vadd.f32 %v1077, %v1221
  %v1234 = vadd.f32 %v1082, %v1226
  %v1235 = vadd.f32 %v1085, %v1229
  %v1236 = vld [vmem:[#allocation3 + $0x8] sm:$0x3]
  %v1237 = vld [vmem:[#allocation3 + $0x14] sm:$0x3]
  %v1239 = vshrl.u32 %v1088, 16
  %v1241 = vrot.slane %v1239, 5
  %v1242 = vshll.u32 %v1088, 16
  %v1244 = vrot.slane %v1242, 6
  %v1245 = vor.u32 %v1241, %v1244
  %v1246 = vrot.slane %v1245, 4
  %v1247 = vrot.slane %v823, 5
  %v1248 = vrot.slane %v819, 6
  %v1249 = vor.u32 %v1247, %v1248
  %v1250 = vsel %vm374, %v1246, %v1249
  %v1251 = vrot.slane %v1249, 4
  %v1253 = vshrl.u32 %v1236, 16
  %v1255 = vrot.slane %v1253, 5
  %v1256 = vshll.u32 %v1236, 16
  %v1258 = vrot.slane %v1256, 6
  %v1259 = vor.u32 %v1255, %v1258
  %v1260 = vsel %vm374, %v1251, %v1259
  %v1262 = vshrl.u32 %v1089, 16
  %v1264 = vrot.slane %v1262, 5
  %v1265 = vshll.u32 %v1089, 16
  %v1267 = vrot.slane %v1265, 6
  %v1268 = vor.u32 %v1264, %v1267
  %v1269 = vrot.slane %v1268, 4
  %v1270 = vrot.slane %v847, 5
  %v1271 = vrot.slane %v843, 6
  %v1272 = vor.u32 %v1270, %v1271
  %v1273 = vsel %vm374, %v1269, %v1272
  %v1274 = vrot.slane %v1272, 4
  %v1276 = vshrl.u32 %v1237, 16
  %v1278 = vrot.slane %v1276, 5
  %v1279 = vshll.u32 %v1237, 16
  %v1281 = vrot.slane %v1279, 6
  %v1282 = vor.u32 %v1278, %v1281
  %v1283 = vsel %vm374, %v1274, %v1282
  %s1284 = scalar_lea.vmem %s3, 192
  %v1285 = vld [vmem:[%s1284] sm:$0xf]
  %v1286 = vld [vmem:[%s1284 + $0x4] sm:$0xf]
  %v1287 = vld [vmem:[%s1284 + $0x8] sm:$0xf]
  %v1288 = vld [vmem:[%s1284 + $0xc] sm:$0xf]
  %v1289 = vld [vmem:[%s1284 + $0x10] sm:$0xf]
  %v1290 = vld [vmem:[%s1284 + $0x14] sm:$0xf]
  %v1291 = vld [vmem:[%s1284 + $0x18] sm:$0xf]
  %v1292 = vld [vmem:[%s1284 + $0x1c] sm:$0xf]
  %v1293 = vld [vmem:[%s1284 + $0x20] sm:$0xf]
  %v1294 = vld [vmem:[%s1284 + $0x24] sm:$0xf]
  %v1295 = vld [vmem:[%s1284 + $0x28] sm:$0xf]
  %v1296 = vld [vmem:[%s1284 + $0x2c] sm:$0xf]
  %v1297 = vld [vmem:[%s1284 + $0x30] sm:$0xf]
  %v1298 = vld [vmem:[%s1284 + $0x34] sm:$0xf]
  %v1299 = vld [vmem:[%s1284 + $0x38] sm:$0xf]
  %v1300 = vld [vmem:[%s1284 + $0x3c] sm:$0xf]
  %v1301 = vunpack.c.l.b16 %v1250
  %v1302 = vunpack.c.l.b16 %v1260
  %v1303 = vunpack.c.l.b16 %v1273
  %v1304 = vunpack.c.l.b16 %v1283
  %v1305 = vpack.c.b16 %v1302, %v1301
  %v1306 = vpack.c.b16 %v1304, %v1303
  %v1325 = vunpack.c.l.b16 %v1285
  %v1326 = vunpack.c.l.b16 %v1286
  %v1327 = vunpack.c.l.b16 %v1287
  %v1328 = vunpack.c.l.b16 %v1288
  %v1329 = vunpack.c.l.b16 %v1289
  %v1330 = vunpack.c.l.b16 %v1290
  %v1331 = vunpack.c.l.b16 %v1291
  %v1332 = vunpack.c.l.b16 %v1292
  %v1333 = vunpack.c.l.b16 %v1293
  %v1334 = vunpack.c.l.b16 %v1294
  %v1335 = vunpack.c.l.b16 %v1295
  %v1336 = vunpack.c.l.b16 %v1296
  %v1337 = vunpack.c.l.b16 %v1297
  %v1338 = vunpack.c.l.b16 %v1298
  %v1339 = vunpack.c.l.b16 %v1299
  %v1340 = vunpack.c.l.b16 %v1300
  %v1341 = vpack.c.b16 %v1326, %v1325
  %v1342 = vpack.c.b16 %v1328, %v1327
  %v1343 = vpack.c.b16 %v1330, %v1329
  %v1344 = vpack.c.b16 %v1332, %v1331
  %v1345 = vpack.c.b16 %v1334, %v1333
  %v1346 = vpack.c.b16 %v1336, %v1335
  %v1347 = vpack.c.b16 %v1338, %v1337
  %v1348 = vpack.c.b16 %v1340, %v1339
  %1357 = vmatprep.subr.bf16.mxu0 0
  %1358 = vmatpush1.bf16.msra.mxu0 %v1341
  %1359 = vmatprep.subr.bf16.mxu0 0
  %1360 = vmatpush1.bf16.msra.mxu0 %v1342
  %1361 = vmatprep.subr.bf16.mxu0 0
  %1362 = vmatpush1.bf16.msra.mxu0 %v1343
  %1363 = vmatprep.subr.bf16.mxu0 0
  %1364 = vmatpush1.bf16.msra.mxu0 %v1344
  %1365 = vmatprep.subr.bf16.mxu0 0
  %1366 = vmatpush1.bf16.msra.mxu0 %v1345
  %1367 = vmatprep.subr.bf16.mxu0 0
  %1368 = vmatpush1.bf16.msra.mxu0 %v1346
  %1369 = vmatprep.subr.bf16.mxu0 0
  %1370 = vmatpush1.bf16.msra.mxu0 %v1347
  %1371 = vmatprep.subr.bf16.mxu0 0
  %1372 = vmatpush1.bf16.msra.mxu0 %v1348
  %1373 = vmatprep.subr.bf16.mxu0 0
  %1374 = vmatpush1.bf16.msra.mxu0 0
  %1375 = vmatprep.subr.bf16.mxu0 0
  %1376 = vmatpush1.bf16.msra.mxu0 0
  %1377 = vmatprep.subr.bf16.mxu0 0
  %1378 = vmatpush1.bf16.msra.mxu0 0
  %1379 = vmatprep.subr.bf16.mxu0 0
  %1380 = vmatpush1.bf16.msra.mxu0 0
  %1381 = vmatprep.subr.bf16.mxu0 0
  %1382 = vmatpush1.bf16.msra.mxu0 0
  %1383 = vmatprep.subr.bf16.mxu0 0
  %1384 = vmatpush1.bf16.msra.mxu0 0
  %1385 = vmatprep.subr.bf16.mxu0 0
  %1386 = vmatpush1.bf16.msra.mxu0 0
  %1387 = vmatprep.subr.bf16.mxu0 0
  %1388 = vmatpush1.bf16.msra.mxu0 0
  %1389 = vmatprep.mubr.bf16.mxu0 0
  %1390 = vmatmul.mubr.bf16.gmra.mrb[0].mxu0 %v1305
  %v1391 = vpop.f32.mrb[0].mxu0
  %v1392 = vadd.f32 0.0, %v1391
  %v1393 = vpop.f32.mrb[0].mxu0
  %v1394 = vpop.f32.mrb[0].mxu0
  %v1395 = vadd.f32 0.0, %v1394
  %v1396 = vpop.f32.mrb[0].mxu0
  %1397 = vmatprep.mubr.bf16.mxu0 0
  %1398 = vmatmul.mubr.bf16.gmra.mrb[0].mxu0 %v1306
  %v1399 = vpop.f32.mrb[0].mxu0
  %v1400 = vadd.f32 0.0, %v1399
  %v1401 = vpop.f32.mrb[0].mxu0
  %v1402 = vpop.f32.mrb[0].mxu0
  %v1403 = vadd.f32 0.0, %v1402
  %v1404 = vpop.f32.mrb[0].mxu0
  %1405 = vdwg.mxu0
  %v1406 = vadd.f32 %v1232, %v1392
  %v1407 = vadd.f32 %v1233, %v1395
  %v1408 = vadd.f32 %v1234, %v1400
  %v1409 = vadd.f32 %v1235, %v1403
  %v1410 = vld [vmem:[%s4] sm:$0x1]
  %v1412 = vlaneseq
  %v1413 = vshrl.u32 %v1412, 7
  %v1414 = vsub.s32 0, %v1413
  %v1415 = vrot.slane %v1410, %v1414
  %v1417 = vadd.f32 %v1406, %v1415
  %v1418 = vadd.f32 %v1407, %v1415
  %v1419 = vadd.f32 %v1408, %v1415
  %v1420 = vadd.f32 %v1409, %v1415
  %v1421 = vmax.f32 %v1417, 0.0
  %v1422 = vmax.f32 %v1418, 0.0
  %v1423 = vmax.f32 %v1419, 0.0
  %v1424 = vmax.f32 %v1420, 0.0
  %v1425 = vpack.c.bf16 %v1422, %v1421
  %v1426 = vpack.c.bf16 %v1424, %v1423
  %v1427 = vld [vmem:[%s5] sm:$0xf]
  %v1428 = vld [vmem:[%s5 + $0x4] sm:$0xf]
  %v1429 = vld [vmem:[%s5 + $0x8] sm:$0xf]
  %v1430 = vld [vmem:[%s5 + $0xc] sm:$0xf]
  %v1431 = vld [vmem:[%s5 + $0x10] sm:$0xf]
  %v1432 = vld [vmem:[%s5 + $0x14] sm:$0xf]
  %v1433 = vld [vmem:[%s5 + $0x18] sm:$0xf]
  %v1434 = vld [vmem:[%s5 + $0x1c] sm:$0xf]
  %v1435 = vld [vmem:[%s5 + $0x20] sm:$0xf]
  %v1436 = vld [vmem:[%s5 + $0x24] sm:$0xf]
  %v1437 = vld [vmem:[%s5 + $0x28] sm:$0xf]
  %v1438 = vld [vmem:[%s5 + $0x2c] sm:$0xf]
  %v1439 = vld [vmem:[%s5 + $0x30] sm:$0xf]
  %v1440 = vld [vmem:[%s5 + $0x34] sm:$0xf]
  %v1441 = vld [vmem:[%s5 + $0x38] sm:$0xf]
  %v1442 = vld [vmem:[%s5 + $0x3c] sm:$0xf]
  %v1443 = vld [vmem:[%s6] sm:$0x1]
  %v1445 = vlaneseq
  %v1446 = vshrl.u32 %v1445, 7
  %v1447 = vsub.s32 0, %v1446
  %v1448 = vrot.slane %v1443, %v1447
  %v1466 = vunpack.c.l.b16 %v1427
  %v1467 = vunpack.c.l.b16 %v1428
  %v1468 = vunpack.c.l.b16 %v1429
  %v1469 = vunpack.c.l.b16 %v1430
  %v1470 = vunpack.c.l.b16 %v1431
  %v1471 = vunpack.c.l.b16 %v1432
  %v1472 = vunpack.c.l.b16 %v1433
  %v1473 = vunpack.c.l.b16 %v1434
  %v1474 = vunpack.c.l.b16 %v1435
  %v1475 = vunpack.c.l.b16 %v1436
  %v1476 = vunpack.c.l.b16 %v1437
  %v1477 = vunpack.c.l.b16 %v1438
  %v1478 = vunpack.c.l.b16 %v1439
  %v1479 = vunpack.c.l.b16 %v1440
  %v1480 = vunpack.c.l.b16 %v1441
  %v1481 = vunpack.c.l.b16 %v1442
  %v1482 = vpack.c.b16 %v1467, %v1466
  %v1483 = vpack.c.b16 %v1469, %v1468
  %v1484 = vpack.c.b16 %v1471, %v1470
  %v1485 = vpack.c.b16 %v1473, %v1472
  %v1486 = vpack.c.b16 %v1475, %v1474
  %v1487 = vpack.c.b16 %v1477, %v1476
  %v1488 = vpack.c.b16 %v1479, %v1478
  %v1489 = vpack.c.b16 %v1481, %v1480
  %1498 = vmatprep.subr.bf16.mxu0 0
  %1499 = vmatpush1.bf16.msra.mxu0 %v1482
  %1500 = vmatprep.subr.bf16.mxu0 0
  %1501 = vmatpush1.bf16.msra.mxu0 %v1483
  %1502 = vmatprep.subr.bf16.mxu0 0
  %1503 = vmatpush1.bf16.msra.mxu0 %v1484
  %1504 = vmatprep.subr.bf16.mxu0 0
  %1505 = vmatpush1.bf16.msra.mxu0 %v1485
  %1506 = vmatprep.subr.bf16.mxu0 0
  %1507 = vmatpush1.bf16.msra.mxu0 %v1486
  %1508 = vmatprep.subr.bf16.mxu0 0
  %1509 = vmatpush1.bf16.msra.mxu0 %v1487
  %1510 = vmatprep.subr.bf16.mxu0 0
  %1511 = vmatpush1.bf16.msra.mxu0 %v1488
  %1512 = vmatprep.subr.bf16.mxu0 0
  %1513 = vmatpush1.bf16.msra.mxu0 %v1489
  %1514 = vmatprep.subr.bf16.mxu0 0
  %1515 = vmatpush1.bf16.msra.mxu0 0
  %1516 = vmatprep.subr.bf16.mxu0 0
  %1517 = vmatpush1.bf16.msra.mxu0 0
  %1518 = vmatprep.subr.bf16.mxu0 0
  %1519 = vmatpush1.bf16.msra.mxu0 0
  %1520 = vmatprep.subr.bf16.mxu0 0
  %1521 = vmatpush1.bf16.msra.mxu0 0
  %1522 = vmatprep.subr.bf16.mxu0 0
  %1523 = vmatpush1.bf16.msra.mxu0 0
  %1524 = vmatprep.subr.bf16.mxu0 0
  %1525 = vmatpush1.bf16.msra.mxu0 0
  %1526 = vmatprep.subr.bf16.mxu0 0
  %1527 = vmatpush1.bf16.msra.mxu0 0
  %1528 = vmatprep.subr.bf16.mxu0 0
  %1529 = vmatpush1.bf16.msra.mxu0 0
  %1530 = vmatprep.mubr.bf16.mxu0 0
  %1531 = vmatmul.mubr.bf16.gmra.mrb[0].mxu0 %v1425
  %v1532 = vpop.f32.mrb[0].mxu0
  %v1533 = vadd.f32 %v1448, %v1532
  %v1534 = vpop.f32.mrb[0].mxu0
  %v1535 = vpop.f32.mrb[0].mxu0
  %v1536 = vadd.f32 %v1448, %v1535
  %v1537 = vpop.f32.mrb[0].mxu0
  %1538 = vmatprep.mubr.bf16.mxu0 0
  %1539 = vmatmul.mubr.bf16.gmra.mrb[0].mxu0 %v1426
  %v1540 = vpop.f32.mrb[0].mxu0
  %v1541 = vadd.f32 %v1448, %v1540
  %v1542 = vpop.f32.mrb[0].mxu0
  %v1543 = vpop.f32.mrb[0].mxu0
  %v1544 = vadd.f32 %v1448, %v1543
  %v1545 = vpop.f32.mrb[0].mxu0
  %1546 = vdwg.mxu0
  %v1547 = vmax.f32 %v1533, 0.0
  %v1548 = vmax.f32 %v1536, 0.0
  %v1549 = vmax.f32 %v1541, 0.0
  %v1550 = vmax.f32 %v1544, 0.0
  %v1551 = vpack.c.bf16 %v1548, %v1547
  %v1552 = vpack.c.bf16 %v1550, %v1549
  %v1553 = vld [vmem:[%s7] sm:$0xf]
  %v1554 = vld [vmem:[%s7 + $0x4] sm:$0xf]
  %v1555 = vld [vmem:[%s7 + $0x8] sm:$0xf]
  %v1556 = vld [vmem:[%s7 + $0xc] sm:$0xf]
  %v1557 = vld [vmem:[%s7 + $0x10] sm:$0xf]
  %v1558 = vld [vmem:[%s7 + $0x14] sm:$0xf]
  %v1559 = vld [vmem:[%s7 + $0x18] sm:$0xf]
  %v1560 = vld [vmem:[%s7 + $0x1c] sm:$0xf]
  %v1561 = vld [vmem:[%s7 + $0x20] sm:$0xf]
  %v1562 = vld [vmem:[%s7 + $0x24] sm:$0xf]
  %v1563 = vld [vmem:[%s7 + $0x28] sm:$0xf]
  %v1564 = vld [vmem:[%s7 + $0x2c] sm:$0xf]
  %v1565 = vld [vmem:[%s7 + $0x30] sm:$0xf]
  %v1566 = vld [vmem:[%s7 + $0x34] sm:$0xf]
  %v1567 = vld [vmem:[%s7 + $0x38] sm:$0xf]
  %v1568 = vld [vmem:[%s7 + $0x3c] sm:$0xf]
  %v1569 = vld [vmem:[%s8] sm:$0x1]
  %v1571 = vlaneseq
  %v1572 = vshrl.u32 %v1571, 7
  %v1573 = vsub.s32 0, %v1572
  %v1574 = vrot.slane %v1569, %v1573
  %v1592 = vunpack.c.l.b16 %v1553
  %v1593 = vunpack.c.l.b16 %v1554
  %v1594 = vunpack.c.l.b16 %v1555
  %v1595 = vunpack.c.l.b16 %v1556
  %v1596 = vunpack.c.l.b16 %v1557
  %v1597 = vunpack.c.l.b16 %v1558
  %v1598 = vunpack.c.l.b16 %v1559
  %v1599 = vunpack.c.l.b16 %v1560
  %v1600 = vunpack.c.l.b16 %v1561
  %v1601 = vunpack.c.l.b16 %v1562
  %v1602 = vunpack.c.l.b16 %v1563
  %v1603 = vunpack.c.l.b16 %v1564
  %v1604 = vunpack.c.l.b16 %v1565
  %v1605 = vunpack.c.l.b16 %v1566
  %v1606 = vunpack.c.l.b16 %v1567
  %v1607 = vunpack.c.l.b16 %v1568
  %v1608 = vpack.c.b16 %v1593, %v1592
  %v1609 = vpack.c.b16 %v1595, %v1594
  %v1610 = vpack.c.b16 %v1597, %v1596
  %v1611 = vpack.c.b16 %v1599, %v1598
  %v1612 = vpack.c.b16 %v1601, %v1600
  %v1613 = vpack.c.b16 %v1603, %v1602
  %v1614 = vpack.c.b16 %v1605, %v1604
  %v1615 = vpack.c.b16 %v1607, %v1606
  %1624 = vmatprep.subr.bf16.mxu0 0
  %1625 = vmatpush1.bf16.msra.mxu0 %v1608
  %1626 = vmatprep.subr.bf16.mxu0 0
  %1627 = vmatpush1.bf16.msra.mxu0 %v1609
  %1628 = vmatprep.subr.bf16.mxu0 0
  %1629 = vmatpush1.bf16.msra.mxu0 %v1610
  %1630 = vmatprep.subr.bf16.mxu0 0
  %1631 = vmatpush1.bf16.msra.mxu0 %v1611
  %1632 = vmatprep.subr.bf16.mxu0 0
  %1633 = vmatpush1.bf16.msra.mxu0 %v1612
  %1634 = vmatprep.subr.bf16.mxu0 0
  %1635 = vmatpush1.bf16.msra.mxu0 %v1613
  %1636 = vmatprep.subr.bf16.mxu0 0
  %1637 = vmatpush1.bf16.msra.mxu0 %v1614
  %1638 = vmatprep.subr.bf16.mxu0 0
  %1639 = vmatpush1.bf16.msra.mxu0 %v1615
  %1640 = vmatprep.subr.bf16.mxu0 0
  %1641 = vmatpush1.bf16.msra.mxu0 0
  %1642 = vmatprep.subr.bf16.mxu0 0
  %1643 = vmatpush1.bf16.msra.mxu0 0
  %1644 = vmatprep.subr.bf16.mxu0 0
  %1645 = vmatpush1.bf16.msra.mxu0 0
  %1646 = vmatprep.subr.bf16.mxu0 0
  %1647 = vmatpush1.bf16.msra.mxu0 0
  %1648 = vmatprep.subr.bf16.mxu0 0
  %1649 = vmatpush1.bf16.msra.mxu0 0
  %1650 = vmatprep.subr.bf16.mxu0 0
  %1651 = vmatpush1.bf16.msra.mxu0 0
  %1652 = vmatprep.subr.bf16.mxu0 0
  %1653 = vmatpush1.bf16.msra.mxu0 0
  %1654 = vmatprep.subr.bf16.mxu0 0
  %1655 = vmatpush1.bf16.msra.mxu0 0
  %1656 = vmatprep.mubr.bf16.mxu0 0
  %1657 = vmatmul.mubr.bf16.gmra.mrb[0].mxu0 %v1551
  %v1658 = vpop.f32.mrb[0].mxu0
  %v1659 = vadd.f32 %v1574, %v1658
  %v1660 = vpop.f32.mrb[0].mxu0
  %v1661 = vpop.f32.mrb[0].mxu0
  %v1662 = vadd.f32 %v1574, %v1661
  %v1663 = vpop.f32.mrb[0].mxu0
  %1664 = vmatprep.mubr.bf16.mxu0 0
  %1665 = vmatmul.mubr.bf16.gmra.mrb[0].mxu0 %v1552
  %v1666 = vpop.f32.mrb[0].mxu0
  %v1667 = vadd.f32 %v1574, %v1666
  %v1668 = vpop.f32.mrb[0].mxu0
  %v1669 = vpop.f32.mrb[0].mxu0
  %v1670 = vadd.f32 %v1574, %v1669
  %v1671 = vpop.f32.mrb[0].mxu0
  %1672 = vdwg.mxu0
  %1673 = vst [vmem:[%s9] sm:$0xff] %v1659
  %1674 = vst [vmem:[%s9 + $0x8] sm:$0xff] %v1662
  %1675 = vst [vmem:[%s9 + $0x10] sm:$0xff] %v1667
  %1676 = vst [vmem:[%s9 + $0x18] sm:$0xff] %v1670
  %s1677 = scalar_lea.vmem %s9, 32
  %1678 = vst [vmem:[%s1677] sm:$0xff] %v1659
  %1679 = vst [vmem:[%s1677 + $0x8] sm:$0xff] %v1662
  %1680 = vst [vmem:[%s1677 + $0x10] sm:$0xff] %v1667
  %1681 = vst [vmem:[%s1677 + $0x18] sm:$0xff] %v1670
  // Predicated region
  $region38: #{decoder_mlp.1} parent=0 // pred_check
    _
  $region39: #{decoder_mlp.1} parent=0 // pred_check_branch
    %1683 = sbr.rel (0) target = $region41
  $region40: #{decoder_mlp.1} parent=0 // pred_region
    _
  $region41: #{decoder_mlp.1} parent=0 // pred_fallthru
    _
  // Predicated region
  $region42: #{decoder_mlp.1} parent=0 // pred_check
    _
  $region43: #{decoder_mlp.1} parent=0 // pred_check_branch
    %1685 = sbr.rel (0) target = $region45
  $region44: #{decoder_mlp.1} parent=0 // pred_region
    _
  $region45: #{decoder_mlp.1} parent=0 // pred_fallthru
    _

</llo_original>
